<compile_context>
chip_gen: v7x
topology: tpu7x:2x2x1
jax: 0.10.0
libtpu: 0.0.40
codegen_flags: <defaults>
</compile_context>

<pallas_src>
from typing import NamedTuple

import jax
import jax.numpy as jnp
from jax.experimental import pallas as pl
from jax.experimental.pallas import tpu as pltpu

N_HIDDEN = 64


def _cdiv(a, b):
    return (a + b - 1) // b


def _round_up(a, b):
    return _cdiv(a, b) * b


def _q_network_kernel(x_ref, w1_ref, b1_ref, w2_ref, b2_ref, o_ref):
    """One batch tile of tanh(x @ W1.T + b1) @ W2.T + b2 in packed layout.

    x_ref : [tile_rows, PACK*n_in]    lane-dense input tile (128 lanes)
    w1_ref: [PACK*n_in, PACK*64]      block-diag = kron(I_PACK, W1^T)
    b1_ref: [1, PACK*64]              b1 tiled PACK times
    w2_ref: [PACK*64, PACK*n_out]     block-diag = kron(I_PACK, W2^T)
    b2_ref: [1, PACK*n_out]           b2 tiled PACK times
    o_ref : [tile_rows, PACK*n_out]
    """
    h = jnp.dot(x_ref[...], w1_ref[...], preferred_element_type=jnp.float32)  # MXU, K=128
    # f32 tanh on the EUP (own VLIW slot).  Kept f32 so v5e does not regress.
    h = jnp.tanh(h + b1_ref[...])
    out = jnp.dot(h, w2_ref[...], preferred_element_type=jnp.float32)         # MXU
    o_ref[...] = (out + b2_ref[...]).astype(o_ref.dtype)


class PackedQNetParams(NamedTuple):
    pack: int
    n_in: int
    n_out: int
    w1_bd: jax.Array   # [pack*n_in, pack*64]
    b1_bd: jax.Array   # [1, pack*64]
    w2_bd: jax.Array   # [pack*64, pack*n_out]
    b2_bd: jax.Array   # [1, pack*n_out]


def pack_params(w1, b1, w2, b2, *, max_pack=64):
    """One-time packing of PyTorch-layout (out, in) Q_Network params."""
    n_hidden, n_in = w1.shape
    n_out = w2.shape[0]
    assert n_hidden == N_HIDDEN and w2.shape == (n_out, n_hidden)
    assert b1.shape == (n_hidden,) and b2.shape == (n_out,)
    if n_in <= 128 and 128 % n_in == 0:
        pack = min(128 // n_in, max_pack)   # 32 for CartPole's n_in=4
    else:
        # Narrow-lane fallback (plain [B, n_in] layout); correct but not lane-dense.
        pack = 1
    eye = jnp.eye(pack, dtype=w1.dtype)
    w1_bd = jnp.kron(eye, w1.T)             # [pack*n_in, pack*64]
    w2_bd = jnp.kron(eye, w2.T)             # [pack*64, pack*n_out]
    b1_bd = jnp.tile(b1, pack)[None, :]     # [1, pack*64]
    b2_bd = jnp.tile(b2, pack)[None, :]     # [1, pack*n_out]
    return PackedQNetParams(pack, n_in, n_out, w1_bd, b1_bd, w2_bd, b2_bd)


def q_network_forward(x, params, *, rows_per_tile_cap=256, min_rows_for_split=16):
    """Q_Network forward: tanh(x @ W1.T + b1) @ W2.T + b2.

    x: [B, n_in] batch-major (exactly like the PyTorch module).  Returns [B, n_out].
    """
    B, n_in = x.shape
    assert n_in == params.n_in
    pack, n_out = params.pack, params.n_out
    lane_k = pack * n_in
    lane_h = pack * N_HIDDEN
    lane_o = pack * n_out

    # Batch tiling: even split (no 2x padded-work cliff), >=2 tiles once there
    # is enough work so the "parallel" grid axis engages both v7x TCs.
    rows_needed = _cdiv(B, pack)
    num_tiles = max(_cdiv(rows_needed, rows_per_tile_cap),
                    2 if rows_needed >= min_rows_for_split else 1)
    tile_rows = _round_up(_cdiv(rows_needed, num_tiles), 8)
    num_tiles = _cdiv(rows_needed, tile_rows)
    rows_padded = num_tiles * tile_rows
    b_padded = rows_padded * pack

    # Zero-pad the batch only when needed (one cheap XLA op; none when B
    # already matches).  Zero rows produce finite outputs that are sliced off;
    # block-diagonal weights keep packed batch elements independent, so the
    # padding can never leak into real outputs.
    if b_padded != B:
        x = jnp.pad(x, ((0, b_padded - B), (0, 0)))
    # Row-major contiguous bit-reshape: no transpose, no data movement.
    x_packed = x.reshape(rows_padded, lane_k)

    itemsize = jnp.dtype(x.dtype).itemsize
    param_bytes = sum(int(a.size) * jnp.dtype(a.dtype).itemsize
                      for a in (params.w1_bd, params.b1_bd, params.w2_bd, params.b2_bd))
    cost = pl.CostEstimate(
        flops=2 * b_padded * N_HIDDEN * (n_in + n_out),
        transcendentals=b_padded * N_HIDDEN,
        bytes_accessed=(int(x_packed.size) + rows_padded * lane_o) * itemsize + param_bytes,
    )

    out_packed = pl.pallas_call(
        _q_network_kernel,
        out_shape=jax.ShapeDtypeStruct((rows_padded, lane_o), x.dtype),
        grid=(num_tiles,),
        in_specs=[
            # Activation stream: one lane-dense batch tile per grid step.
            pl.BlockSpec((tile_rows, lane_k), lambda i: (i, 0)),
            # Parameters: constant block index -> fetched once, VMEM-resident.
            pl.BlockSpec((lane_k, lane_h), lambda i: (0, 0)),
            pl.BlockSpec((1, lane_h), lambda i: (0, 0)),
            pl.BlockSpec((lane_h, lane_o), lambda i: (0, 0)),
            pl.BlockSpec((1, lane_o), lambda i: (0, 0)),
        ],
        out_specs=pl.BlockSpec((tile_rows, lane_o), lambda i: (i, 0)),
        compiler_params=pltpu.CompilerParams(
            # Independent batch tiles: shard across v7x's two TensorCores;
            # harmless serial loop on v5e/v6e.
            dimension_semantics=("parallel",),
        ),
        cost_estimate=cost,
    )(x_packed, params.w1_bd, params.b1_bd, params.w2_bd, params.b2_bd)

    # Free bit-reshape back to batch-major; slice padding only when present.
    out = out_packed.reshape(b_padded, n_out)
    if b_padded != B:
        out = out[:B]
    return out


def init_params(key, n_in, n_out, n_hidden=N_HIDDEN, dtype=jnp.float32):
    # PyTorch nn.Linear default init: U(-1/sqrt(fan_in), 1/sqrt(fan_in)),
    # weights in [out_features, in_features] layout.
    k1, k2, k3, k4 = jax.random.split(key, 4)
    bound1 = 1.0 / jnp.sqrt(jnp.float32(n_in))
    bound2 = 1.0 / jnp.sqrt(jnp.float32(n_hidden))
    w1 = jax.random.uniform(k1, (n_hidden, n_in), dtype, -bound1, bound1)
    b1 = jax.random.uniform(k2, (n_hidden,), dtype, -bound1, bound1)
    w2 = jax.random.uniform(k3, (n_out, n_hidden), dtype, -bound2, bound2)
    b2 = jax.random.uniform(k4, (n_out,), dtype, -bound2, bound2)
    return w1, b1, w2, b2


def reference_forward(x, w1, b1, w2, b2):
    h = jnp.tanh(x @ w1.T + b1)
    return h @ w2.T + b2


if __name__ == "__main__":
    key = jax.random.PRNGKey(0)
    kx1, kx2, kx3, kp = jax.random.split(key, 4)

    # CartPole-like dims: observation dim = 4, action dim = 2.
    n_in, n_out = 4, 2
    w1, b1, w2, b2 = init_params(kp, n_in, n_out)
    params = pack_params(w1, b1, w2, b2)

    # Small batch: single grid step, batch padded up to one 8x128 packed tile.
    x1 = jax.random.normal(kx1, (8, n_in), dtype=jnp.float32)
    out1 = jax.block_until_ready(q_network_forward(x1, params))
    ref1 = reference_forward(x1, w1, b1, w2, b2)
    assert out1.shape == (8, n_out)
    assert jnp.allclose(out1, ref1, atol=1e-5, rtol=1e-5), "mismatch vs reference (B=8)"

    # Batch not a multiple of PACK: pad + slice path, still a single tile.
    x2 = jax.random.normal(kx2, (300, n_in), dtype=jnp.float32)
    out2 = jax.block_until_ready(q_network_forward(x2, params))
    ref2 = reference_forward(x2, w1, b1, w2, b2)
    assert out2.shape == (300, n_out)
    assert jnp.allclose(out2, ref2, atol=1e-5, rtol=1e-5), "mismatch vs reference (B=300)"

    # Larger batch: even 2-tile split ("parallel" across cores on v7x).
    x3 = jax.random.normal(kx3, (600, n_in), dtype=jnp.float32)
    out3 = jax.block_until_ready(q_network_forward(x3, params))
    ref3 = reference_forward(x3, w1, b1, w2, b2)
    assert out3.shape == (600, n_out)
    assert jnp.allclose(out3, ref3, atol=1e-5, rtol=1e-5), "mismatch vs reference (B=600)"

    print("KERNEL_OK")
</pallas_src>

<mosaic_0001>
module attributes {stable_mosaic.version = 11 : i64} {
  func.func @_q_network_kernel(%arg0: i32, %arg1: memref<8x128xf32, #tpu.memory_space<vmem>>, %arg2: memref<128x2048xf32, #tpu.memory_space<vmem>>, %arg3: memref<1x2048xf32, #tpu.memory_space<vmem>>, %arg4: memref<2048x64xf32, #tpu.memory_space<vmem>>, %arg5: memref<1x64xf32, #tpu.memory_space<vmem>>, %arg6: memref<8x64xf32, #tpu.memory_space<vmem>>) attributes {dimension_semantics = [#tpu.dimension_semantics<parallel>], iteration_bounds = array<i64: 1>, scalar_prefetch = 0 : i64, scratch_operands = 0 : i64, tpu.core_type = #tpu.core_type<tc>, window_params = [{transform_indices = @transform_0, window_bounds = array<i64: 8, 128>}, {pipeline_mode = #tpu.pipeline_mode<synchronous>, transform_indices = @transform_1, window_bounds = array<i64: 128, 2048>}, {pipeline_mode = #tpu.pipeline_mode<synchronous>, transform_indices = @transform_2, window_bounds = array<i64: 1, 2048>}, {pipeline_mode = #tpu.pipeline_mode<synchronous>, transform_indices = @transform_3, window_bounds = array<i64: 2048, 64>}, {pipeline_mode = #tpu.pipeline_mode<synchronous>, transform_indices = @transform_4, window_bounds = array<i64: 1, 64>}, {transform_indices = @transform_5, window_bounds = array<i64: 8, 64>}]} {
    %c0 = arith.constant 0 : index
    %c0_0 = arith.constant 0 : index
    %0 = vector.load %arg1[%c0, %c0_0] : memref<8x128xf32, #tpu.memory_space<vmem>>, vector<8x128xf32>
    %c0_1 = arith.constant 0 : index
    %c0_2 = arith.constant 0 : index
    %1 = vector.load %arg2[%c0_1, %c0_2] : memref<128x2048xf32, #tpu.memory_space<vmem>>, vector<128x2048xf32>
    %cst = arith.constant dense<0.000000e+00> : vector<8x2048xf32>
    %2 = tpu.matmul %0, %1, %cst {dimension_numbers = #tpu.dot_dimension_numbers<[1], [0], [0], [1], [0, 0, 1, 1], [], []>} : vector<8x128xf32>, vector<128x2048xf32>, vector<8x2048xf32> -> vector<8x2048xf32>
    %c0_3 = arith.constant 0 : index
    %c0_4 = arith.constant 0 : index
    %3 = vector.load %arg3[%c0_3, %c0_4] : memref<1x2048xf32, #tpu.memory_space<vmem>>, vector<1x2048xf32>
    %4 = vector.broadcast %3 : vector<1x2048xf32> to vector<8x2048xf32>
    %5 = arith.addf %2, %4 : vector<8x2048xf32>
    %6 = math.tanh %5 : vector<8x2048xf32>
    %c0_5 = arith.constant 0 : index
    %c0_6 = arith.constant 0 : index
    %7 = vector.load %arg4[%c0_5, %c0_6] : memref<2048x64xf32, #tpu.memory_space<vmem>>, vector<2048x64xf32>
    %cst_7 = arith.constant dense<0.000000e+00> : vector<8x64xf32>
    %8 = tpu.matmul %6, %7, %cst_7 {dimension_numbers = #tpu.dot_dimension_numbers<[1], [0], [0], [1], [0, 0, 1, 1], [], []>} : vector<8x2048xf32>, vector<2048x64xf32>, vector<8x64xf32> -> vector<8x64xf32>
    %c0_8 = arith.constant 0 : index
    %c0_9 = arith.constant 0 : index
    %9 = vector.load %arg5[%c0_8, %c0_9] : memref<1x64xf32, #tpu.memory_space<vmem>>, vector<1x64xf32>
    %10 = vector.broadcast %9 : vector<1x64xf32> to vector<8x64xf32>
    %11 = arith.addf %8, %10 : vector<8x64xf32>
    %c0_10 = arith.constant 0 : index
    %c0_11 = arith.constant 0 : index
    %12 = vector.load %arg6[%c0_10, %c0_11] : memref<8x64xf32, #tpu.memory_space<vmem>>, vector<8x64xf32>
    tpu.vector_store %arg6[%c0_10, %c0_11], %11 {strides = array<i32>} : memref<8x64xf32, #tpu.memory_space<vmem>>, vector<8x64xf32>,
    return
  }
  func.func @transform_0(%arg0: i32) -> (i32, i32) {
    %c0_i32 = arith.constant 0 : i32
    %c0_i32_0 = arith.constant 0 : i32
    return %arg0, %c0_i32 : i32, i32
  }
  func.func @transform_1(%arg0: i32) -> (i32, i32) {
    %c0_i32 = arith.constant 0 : i32
    %c0_i32_0 = arith.constant 0 : i32
    %c0_i32_1 = arith.constant 0 : i32
    return %c0_i32, %c0_i32_0 : i32, i32
  }
  func.func @transform_2(%arg0: i32) -> (i32, i32) {
    %c0_i32 = arith.constant 0 : i32
    %c0_i32_0 = arith.constant 0 : i32
    %c0_i32_1 = arith.constant 0 : i32
    return %c0_i32, %c0_i32_0 : i32, i32
  }
  func.func @transform_3(%arg0: i32) -> (i32, i32) {
    %c0_i32 = arith.constant 0 : i32
    %c0_i32_0 = arith.constant 0 : i32
    %c0_i32_1 = arith.constant 0 : i32
    return %c0_i32, %c0_i32_0 : i32, i32
  }
  func.func @transform_4(%arg0: i32) -> (i32, i32) {
    %c0_i32 = arith.constant 0 : i32
    %c0_i32_0 = arith.constant 0 : i32
    %c0_i32_1 = arith.constant 0 : i32
    return %c0_i32, %c0_i32_0 : i32, i32
  }
  func.func @transform_5(%arg0: i32) -> (i32, i32) {
    %c0_i32 = arith.constant 0 : i32
    %c0_i32_0 = arith.constant 0 : i32
    return %arg0, %c0_i32 : i32, i32
  }
}

</mosaic_0001>

<llo_original>
// kernel: tpu_custom_call.1
$region0: #{tpu_custom_call.1}
  #allocation0 [shape = 'u32[]', space=smem, size = 0x4, offset = 0x4, fixed_abs, tag = 'smem constant byte address 0x4 - core index']
  #allocation1 [shape = 'u32[144,128]{1,0:T(1,128)}', space=vmem, size = 0x12000, scoped, tag = 'internal scratch']
  %s0 = inlined_call_operand.vmem [shape: f32[8,128], index: 0, kind: input, shape index: {}]
  %s1 = inlined_call_operand.vmem [shape: f32[128,2048], index: 1, kind: input, shape index: {}]
  %s2 = inlined_call_operand.vmem [shape: f32[1,2048], index: 2, kind: input, shape index: {}]
  %s3 = inlined_call_operand.vmem [shape: f32[2048,64], index: 3, kind: input, shape index: {}]
  %s4 = inlined_call_operand.vmem [shape: f32[1,64], index: 4, kind: input, shape index: {}]
  %s5 = inlined_call_operand.hbm [shape: f32[8,64], index: 5, kind: output, shape index: {}]
  %s6 = sld [smem:[#allocation0]]
  $region30: #{tpu_custom_call.1} parent=0
    _
  %s8 = ssub.s32 1, %s6
  %s9 = scalar_select 0, %s8, %s6
  $region1: #{tpu_custom_call.1} parent=0
    #allocation2 [shape = 'u8[4096]{0}', space=vmem, size = 0x1000, scoped, tag = 'output window, operand 0, single buffered']
    #allocation3 [shape = 's32[1]{0}', space=sflag, size = 0x4, scoped, tag = 'scoped memory for tpu_custom_call.1']
    %10 = vsyncpa [#allocation3], 0
    // Predicated region
    $region2: #{tpu_custom_call.1} parent=1 // pred_check
      _
    $region3: #{tpu_custom_call.1} parent=1 // pred_check_branch
      %12 = sbr.rel (0) target = $region5
    $region4: #{tpu_custom_call.1} parent=1 // pred_region
      _
    $region5: #{tpu_custom_call.1} parent=1 // pred_fallthru
      _
    // Predicated region
    $region6: #{tpu_custom_call.1} parent=1 // pred_check
      _
    $region7: #{tpu_custom_call.1} parent=1 // pred_check_branch
      %14 = sbr.rel (0) target = $region9
    $region8: #{tpu_custom_call.1} parent=1 // pred_region
      _
    $region9: #{tpu_custom_call.1} parent=1 // pred_fallthru
      _
    // Predicated region
    $region10: #{tpu_custom_call.1} parent=1 // pred_check
      _
    $region11: #{tpu_custom_call.1} parent=1 // pred_check_branch
      %16 = sbr.rel (0) target = $region13
    $region12: #{tpu_custom_call.1} parent=1 // pred_region
      _
    $region13: #{tpu_custom_call.1} parent=1 // pred_fallthru
      _
    // Predicated region
    $region14: #{tpu_custom_call.1} parent=1 // pred_check
      _
    $region15: #{tpu_custom_call.1} parent=1 // pred_check_branch
      %18 = sbr.rel (0) target = $region17
    $region16: #{tpu_custom_call.1} parent=1 // pred_region
      _
    $region17: #{tpu_custom_call.1} parent=1 // pred_fallthru
      _
    // Predicated region
    $region18: #{tpu_custom_call.1} parent=1 // pred_check
      _
    $region19: #{tpu_custom_call.1} parent=1 // pred_check_branch
      %20 = sbr.rel (0) target = $region21
    $region20: #{tpu_custom_call.1} parent=1 // pred_region
      _
    $region21: #{tpu_custom_call.1} parent=1 // pred_fallthru
      _
    %v21 = vld [vmem:[%s0] sm:$0xff]
    %v22 = vld [vmem:[%s1] sm:$0xff]
    %v23 = vld [vmem:[%s1 + $0x8] sm:$0xff]
    %v24 = vld [vmem:[%s1 + $0x10] sm:$0xff]
    %v25 = vld [vmem:[%s1 + $0x18] sm:$0xff]
    %v26 = vld [vmem:[%s1 + $0x20] sm:$0xff]
    %v27 = vld [vmem:[%s1 + $0x28] sm:$0xff]
    %v28 = vld [vmem:[%s1 + $0x30] sm:$0xff]
    %v29 = vld [vmem:[%s1 + $0x38] sm:$0xff]
    %v30 = vld [vmem:[%s1 + $0x40] sm:$0xff]
    %v31 = vld [vmem:[%s1 + $0x48] sm:$0xff]
    %v32 = vld [vmem:[%s1 + $0x50] sm:$0xff]
    %v33 = vld [vmem:[%s1 + $0x58] sm:$0xff]
    %v34 = vld [vmem:[%s1 + $0x60] sm:$0xff]
    %v35 = vld [vmem:[%s1 + $0x68] sm:$0xff]
    %v36 = vld [vmem:[%s1 + $0x70] sm:$0xff]
    %v37 = vld [vmem:[%s1 + $0x78] sm:$0xff]
    %v38 = vld [vmem:[%s1 + $0x80] sm:$0xff]
    %v39 = vld [vmem:[%s1 + $0x88] sm:$0xff]
    %v40 = vld [vmem:[%s1 + $0x90] sm:$0xff]
    %v41 = vld [vmem:[%s1 + $0x98] sm:$0xff]
    %v42 = vld [vmem:[%s1 + $0xa0] sm:$0xff]
    %v43 = vld [vmem:[%s1 + $0xa8] sm:$0xff]
    %v44 = vld [vmem:[%s1 + $0xb0] sm:$0xff]
    %v45 = vld [vmem:[%s1 + $0xb8] sm:$0xff]
    %v46 = vld [vmem:[%s1 + $0xc0] sm:$0xff]
    %v47 = vld [vmem:[%s1 + $0xc8] sm:$0xff]
    %v48 = vld [vmem:[%s1 + $0xd0] sm:$0xff]
    %v49 = vld [vmem:[%s1 + $0xd8] sm:$0xff]
    %v50 = vld [vmem:[%s1 + $0xe0] sm:$0xff]
    %v51 = vld [vmem:[%s1 + $0xe8] sm:$0xff]
    %v52 = vld [vmem:[%s1 + $0xf0] sm:$0xff]
    %v53 = vld [vmem:[%s1 + $0xf8] sm:$0xff]
    %v54 = vld [vmem:[%s1 + $0x100] sm:$0xff]
    %v55 = vld [vmem:[%s1 + $0x108] sm:$0xff]
    %v56 = vld [vmem:[%s1 + $0x110] sm:$0xff]
    %v57 = vld [vmem:[%s1 + $0x118] sm:$0xff]
    %v58 = vld [vmem:[%s1 + $0x120] sm:$0xff]
    %v59 = vld [vmem:[%s1 + $0x128] sm:$0xff]
    %v60 = vld [vmem:[%s1 + $0x130] sm:$0xff]
    %v61 = vld [vmem:[%s1 + $0x138] sm:$0xff]
    %v62 = vld [vmem:[%s1 + $0x140] sm:$0xff]
    %v63 = vld [vmem:[%s1 + $0x148] sm:$0xff]
    %v64 = vld [vmem:[%s1 + $0x150] sm:$0xff]
    %v65 = vld [vmem:[%s1 + $0x158] sm:$0xff]
    %v66 = vld [vmem:[%s1 + $0x160] sm:$0xff]
    %v67 = vld [vmem:[%s1 + $0x168] sm:$0xff]
    %v68 = vld [vmem:[%s1 + $0x170] sm:$0xff]
    %v69 = vld [vmem:[%s1 + $0x178] sm:$0xff]
    %v70 = vld [vmem:[%s1 + $0x180] sm:$0xff]
    %v71 = vld [vmem:[%s1 + $0x188] sm:$0xff]
    %v72 = vld [vmem:[%s1 + $0x190] sm:$0xff]
    %v73 = vld [vmem:[%s1 + $0x198] sm:$0xff]
    %v74 = vld [vmem:[%s1 + $0x1a0] sm:$0xff]
    %v75 = vld [vmem:[%s1 + $0x1a8] sm:$0xff]
    %v76 = vld [vmem:[%s1 + $0x1b0] sm:$0xff]
    %v77 = vld [vmem:[%s1 + $0x1b8] sm:$0xff]
    %v78 = vld [vmem:[%s1 + $0x1c0] sm:$0xff]
    %v79 = vld [vmem:[%s1 + $0x1c8] sm:$0xff]
    %v80 = vld [vmem:[%s1 + $0x1d0] sm:$0xff]
    %v81 = vld [vmem:[%s1 + $0x1d8] sm:$0xff]
    %v82 = vld [vmem:[%s1 + $0x1e0] sm:$0xff]
    %v83 = vld [vmem:[%s1 + $0x1e8] sm:$0xff]
    %v84 = vld [vmem:[%s1 + $0x1f0] sm:$0xff]
    %v85 = vld [vmem:[%s1 + $0x1f8] sm:$0xff]
    %v86 = vld [vmem:[%s1 + $0x200] sm:$0xff]
    %v87 = vld [vmem:[%s1 + $0x208] sm:$0xff]
    %v88 = vld [vmem:[%s1 + $0x210] sm:$0xff]
    %v89 = vld [vmem:[%s1 + $0x218] sm:$0xff]
    %v90 = vld [vmem:[%s1 + $0x220] sm:$0xff]
    %v91 = vld [vmem:[%s1 + $0x228] sm:$0xff]
    %v92 = vld [vmem:[%s1 + $0x230] sm:$0xff]
    %v93 = vld [vmem:[%s1 + $0x238] sm:$0xff]
    %v94 = vld [vmem:[%s1 + $0x240] sm:$0xff]
    %v95 = vld [vmem:[%s1 + $0x248] sm:$0xff]
    %v96 = vld [vmem:[%s1 + $0x250] sm:$0xff]
    %v97 = vld [vmem:[%s1 + $0x258] sm:$0xff]
    %v98 = vld [vmem:[%s1 + $0x260] sm:$0xff]
    %v99 = vld [vmem:[%s1 + $0x268] sm:$0xff]
    %v100 = vld [vmem:[%s1 + $0x270] sm:$0xff]
    %v101 = vld [vmem:[%s1 + $0x278] sm:$0xff]
    %v102 = vld [vmem:[%s1 + $0x280] sm:$0xff]
    %v103 = vld [vmem:[%s1 + $0x288] sm:$0xff]
    %v104 = vld [vmem:[%s1 + $0x290] sm:$0xff]
    %v105 = vld [vmem:[%s1 + $0x298] sm:$0xff]
    %v106 = vld [vmem:[%s1 + $0x2a0] sm:$0xff]
    %v107 = vld [vmem:[%s1 + $0x2a8] sm:$0xff]
    %v108 = vld [vmem:[%s1 + $0x2b0] sm:$0xff]
    %v109 = vld [vmem:[%s1 + $0x2b8] sm:$0xff]
    %v110 = vld [vmem:[%s1 + $0x2c0] sm:$0xff]
    %v111 = vld [vmem:[%s1 + $0x2c8] sm:$0xff]
    %v112 = vld [vmem:[%s1 + $0x2d0] sm:$0xff]
    %v113 = vld [vmem:[%s1 + $0x2d8] sm:$0xff]
    %v114 = vld [vmem:[%s1 + $0x2e0] sm:$0xff]
    %v115 = vld [vmem:[%s1 + $0x2e8] sm:$0xff]
    %v116 = vld [vmem:[%s1 + $0x2f0] sm:$0xff]
    %v117 = vld [vmem:[%s1 + $0x2f8] sm:$0xff]
    %v118 = vld [vmem:[%s1 + $0x300] sm:$0xff]
    %v119 = vld [vmem:[%s1 + $0x308] sm:$0xff]
    %v120 = vld [vmem:[%s1 + $0x310] sm:$0xff]
    %v121 = vld [vmem:[%s1 + $0x318] sm:$0xff]
    %v122 = vld [vmem:[%s1 + $0x320] sm:$0xff]
    %v123 = vld [vmem:[%s1 + $0x328] sm:$0xff]
    %v124 = vld [vmem:[%s1 + $0x330] sm:$0xff]
    %v125 = vld [vmem:[%s1 + $0x338] sm:$0xff]
    %v126 = vld [vmem:[%s1 + $0x340] sm:$0xff]
    %v127 = vld [vmem:[%s1 + $0x348] sm:$0xff]
    %v128 = vld [vmem:[%s1 + $0x350] sm:$0xff]
    %v129 = vld [vmem:[%s1 + $0x358] sm:$0xff]
    %v130 = vld [vmem:[%s1 + $0x360] sm:$0xff]
    %v131 = vld [vmem:[%s1 + $0x368] sm:$0xff]
    %v132 = vld [vmem:[%s1 + $0x370] sm:$0xff]
    %v133 = vld [vmem:[%s1 + $0x378] sm:$0xff]
    %v134 = vld [vmem:[%s1 + $0x380] sm:$0xff]
    %v135 = vld [vmem:[%s1 + $0x388] sm:$0xff]
    %v136 = vld [vmem:[%s1 + $0x390] sm:$0xff]
    %v137 = vld [vmem:[%s1 + $0x398] sm:$0xff]
    %v138 = vld [vmem:[%s1 + $0x3a0] sm:$0xff]
    %v139 = vld [vmem:[%s1 + $0x3a8] sm:$0xff]
    %v140 = vld [vmem:[%s1 + $0x3b0] sm:$0xff]
    %v141 = vld [vmem:[%s1 + $0x3b8] sm:$0xff]
    %v142 = vld [vmem:[%s1 + $0x3c0] sm:$0xff]
    %v143 = vld [vmem:[%s1 + $0x3c8] sm:$0xff]
    %v144 = vld [vmem:[%s1 + $0x3d0] sm:$0xff]
    %v145 = vld [vmem:[%s1 + $0x3d8] sm:$0xff]
    %v146 = vld [vmem:[%s1 + $0x3e0] sm:$0xff]
    %v147 = vld [vmem:[%s1 + $0x3e8] sm:$0xff]
    %v148 = vld [vmem:[%s1 + $0x3f0] sm:$0xff]
    %v149 = vld [vmem:[%s1 + $0x3f8] sm:$0xff]
    %v150 = vld [vmem:[%s1 + $0x400] sm:$0xff]
    %v151 = vld [vmem:[%s1 + $0x408] sm:$0xff]
    %v152 = vld [vmem:[%s1 + $0x410] sm:$0xff]
    %v153 = vld [vmem:[%s1 + $0x418] sm:$0xff]
    %v154 = vld [vmem:[%s1 + $0x420] sm:$0xff]
    %v155 = vld [vmem:[%s1 + $0x428] sm:$0xff]
    %v156 = vld [vmem:[%s1 + $0x430] sm:$0xff]
    %v157 = vld [vmem:[%s1 + $0x438] sm:$0xff]
    %v158 = vld [vmem:[%s1 + $0x440] sm:$0xff]
    %v159 = vld [vmem:[%s1 + $0x448] sm:$0xff]
    %v160 = vld [vmem:[%s1 + $0x450] sm:$0xff]
    %v161 = vld [vmem:[%s1 + $0x458] sm:$0xff]
    %v162 = vld [vmem:[%s1 + $0x460] sm:$0xff]
    %v163 = vld [vmem:[%s1 + $0x468] sm:$0xff]
    %v164 = vld [vmem:[%s1 + $0x470] sm:$0xff]
    %v165 = vld [vmem:[%s1 + $0x478] sm:$0xff]
    %v166 = vld [vmem:[%s1 + $0x480] sm:$0xff]
    %v167 = vld [vmem:[%s1 + $0x488] sm:$0xff]
    %v168 = vld [vmem:[%s1 + $0x490] sm:$0xff]
    %v169 = vld [vmem:[%s1 + $0x498] sm:$0xff]
    %v170 = vld [vmem:[%s1 + $0x4a0] sm:$0xff]
    %v171 = vld [vmem:[%s1 + $0x4a8] sm:$0xff]
    %v172 = vld [vmem:[%s1 + $0x4b0] sm:$0xff]
    %v173 = vld [vmem:[%s1 + $0x4b8] sm:$0xff]
    %v174 = vld [vmem:[%s1 + $0x4c0] sm:$0xff]
    %v175 = vld [vmem:[%s1 + $0x4c8] sm:$0xff]
    %v176 = vld [vmem:[%s1 + $0x4d0] sm:$0xff]
    %v177 = vld [vmem:[%s1 + $0x4d8] sm:$0xff]
    %v178 = vld [vmem:[%s1 + $0x4e0] sm:$0xff]
    %v179 = vld [vmem:[%s1 + $0x4e8] sm:$0xff]
    %v180 = vld [vmem:[%s1 + $0x4f0] sm:$0xff]
    %v181 = vld [vmem:[%s1 + $0x4f8] sm:$0xff]
    %v182 = vld [vmem:[%s1 + $0x500] sm:$0xff]
    %v183 = vld [vmem:[%s1 + $0x508] sm:$0xff]
    %v184 = vld [vmem:[%s1 + $0x510] sm:$0xff]
    %v185 = vld [vmem:[%s1 + $0x518] sm:$0xff]
    %v186 = vld [vmem:[%s1 + $0x520] sm:$0xff]
    %v187 = vld [vmem:[%s1 + $0x528] sm:$0xff]
    %v188 = vld [vmem:[%s1 + $0x530] sm:$0xff]
    %v189 = vld [vmem:[%s1 + $0x538] sm:$0xff]
    %v190 = vld [vmem:[%s1 + $0x540] sm:$0xff]
    %v191 = vld [vmem:[%s1 + $0x548] sm:$0xff]
    %v192 = vld [vmem:[%s1 + $0x550] sm:$0xff]
    %v193 = vld [vmem:[%s1 + $0x558] sm:$0xff]
    %v194 = vld [vmem:[%s1 + $0x560] sm:$0xff]
    %v195 = vld [vmem:[%s1 + $0x568] sm:$0xff]
    %v196 = vld [vmem:[%s1 + $0x570] sm:$0xff]
    %v197 = vld [vmem:[%s1 + $0x578] sm:$0xff]
    %v198 = vld [vmem:[%s1 + $0x580] sm:$0xff]
    %v199 = vld [vmem:[%s1 + $0x588] sm:$0xff]
    %v200 = vld [vmem:[%s1 + $0x590] sm:$0xff]
    %v201 = vld [vmem:[%s1 + $0x598] sm:$0xff]
    %v202 = vld [vmem:[%s1 + $0x5a0] sm:$0xff]
    %v203 = vld [vmem:[%s1 + $0x5a8] sm:$0xff]
    %v204 = vld [vmem:[%s1 + $0x5b0] sm:$0xff]
    %v205 = vld [vmem:[%s1 + $0x5b8] sm:$0xff]
    %v206 = vld [vmem:[%s1 + $0x5c0] sm:$0xff]
    %v207 = vld [vmem:[%s1 + $0x5c8] sm:$0xff]
    %v208 = vld [vmem:[%s1 + $0x5d0] sm:$0xff]
    %v209 = vld [vmem:[%s1 + $0x5d8] sm:$0xff]
    %v210 = vld [vmem:[%s1 + $0x5e0] sm:$0xff]
    %v211 = vld [vmem:[%s1 + $0x5e8] sm:$0xff]
    %v212 = vld [vmem:[%s1 + $0x5f0] sm:$0xff]
    %v213 = vld [vmem:[%s1 + $0x5f8] sm:$0xff]
    %v214 = vld [vmem:[%s1 + $0x600] sm:$0xff]
    %v215 = vld [vmem:[%s1 + $0x608] sm:$0xff]
    %v216 = vld [vmem:[%s1 + $0x610] sm:$0xff]
    %v217 = vld [vmem:[%s1 + $0x618] sm:$0xff]
    %v218 = vld [vmem:[%s1 + $0x620] sm:$0xff]
    %v219 = vld [vmem:[%s1 + $0x628] sm:$0xff]
    %v220 = vld [vmem:[%s1 + $0x630] sm:$0xff]
    %v221 = vld [vmem:[%s1 + $0x638] sm:$0xff]
    %v222 = vld [vmem:[%s1 + $0x640] sm:$0xff]
    %v223 = vld [vmem:[%s1 + $0x648] sm:$0xff]
    %v224 = vld [vmem:[%s1 + $0x650] sm:$0xff]
    %v225 = vld [vmem:[%s1 + $0x658] sm:$0xff]
    %v226 = vld [vmem:[%s1 + $0x660] sm:$0xff]
    %v227 = vld [vmem:[%s1 + $0x668] sm:$0xff]
    %v228 = vld [vmem:[%s1 + $0x670] sm:$0xff]
    %v229 = vld [vmem:[%s1 + $0x678] sm:$0xff]
    %v230 = vld [vmem:[%s1 + $0x680] sm:$0xff]
    %v231 = vld [vmem:[%s1 + $0x688] sm:$0xff]
    %v232 = vld [vmem:[%s1 + $0x690] sm:$0xff]
    %v233 = vld [vmem:[%s1 + $0x698] sm:$0xff]
    %v234 = vld [vmem:[%s1 + $0x6a0] sm:$0xff]
    %v235 = vld [vmem:[%s1 + $0x6a8] sm:$0xff]
    %v236 = vld [vmem:[%s1 + $0x6b0] sm:$0xff]
    %v237 = vld [vmem:[%s1 + $0x6b8] sm:$0xff]
    %v238 = vld [vmem:[%s1 + $0x6c0] sm:$0xff]
    %v239 = vld [vmem:[%s1 + $0x6c8] sm:$0xff]
    %v240 = vld [vmem:[%s1 + $0x6d0] sm:$0xff]
    %v241 = vld [vmem:[%s1 + $0x6d8] sm:$0xff]
    %v242 = vld [vmem:[%s1 + $0x6e0] sm:$0xff]
    %v243 = vld [vmem:[%s1 + $0x6e8] sm:$0xff]
    %v244 = vld [vmem:[%s1 + $0x6f0] sm:$0xff]
    %v245 = vld [vmem:[%s1 + $0x6f8] sm:$0xff]
    %v246 = vld [vmem:[%s1 + $0x700] sm:$0xff]
    %v247 = vld [vmem:[%s1 + $0x708] sm:$0xff]
    %v248 = vld [vmem:[%s1 + $0x710] sm:$0xff]
    %v249 = vld [vmem:[%s1 + $0x718] sm:$0xff]
    %v250 = vld [vmem:[%s1 + $0x720] sm:$0xff]
    %v251 = vld [vmem:[%s1 + $0x728] sm:$0xff]
    %v252 = vld [vmem:[%s1 + $0x730] sm:$0xff]
    %v253 = vld [vmem:[%s1 + $0x738] sm:$0xff]
    %v254 = vld [vmem:[%s1 + $0x740] sm:$0xff]
    %v255 = vld [vmem:[%s1 + $0x748] sm:$0xff]
    %v256 = vld [vmem:[%s1 + $0x750] sm:$0xff]
    %v257 = vld [vmem:[%s1 + $0x758] sm:$0xff]
    %v258 = vld [vmem:[%s1 + $0x760] sm:$0xff]
    %v259 = vld [vmem:[%s1 + $0x768] sm:$0xff]
    %v260 = vld [vmem:[%s1 + $0x770] sm:$0xff]
    %v261 = vld [vmem:[%s1 + $0x778] sm:$0xff]
    %v262 = vld [vmem:[%s1 + $0x780] sm:$0xff]
    %v263 = vld [vmem:[%s1 + $0x788] sm:$0xff]
    %v264 = vld [vmem:[%s1 + $0x790] sm:$0xff]
    %v265 = vld [vmem:[%s1 + $0x798] sm:$0xff]
    %v266 = vld [vmem:[%s1 + $0x7a0] sm:$0xff]
    %v267 = vld [vmem:[%s1 + $0x7a8] sm:$0xff]
    %v268 = vld [vmem:[%s1 + $0x7b0] sm:$0xff]
    %v269 = vld [vmem:[%s1 + $0x7b8] sm:$0xff]
    %v270 = vld [vmem:[%s1 + $0x7c0] sm:$0xff]
    %v271 = vld [vmem:[%s1 + $0x7c8] sm:$0xff]
    %v272 = vld [vmem:[%s1 + $0x7d0] sm:$0xff]
    %v273 = vld [vmem:[%s1 + $0x7d8] sm:$0xff]
    %v274 = vld [vmem:[%s1 + $0x7e0] sm:$0xff]
    %v275 = vld [vmem:[%s1 + $0x7e8] sm:$0xff]
    %v276 = vld [vmem:[%s1 + $0x7f0] sm:$0xff]
    %v277 = vld [vmem:[%s1 + $0x7f8] sm:$0xff]
    %v278 = vld [vmem:[%s2] sm:$0xff]
    %v279 = vld [vmem:[%s2 + $0x8] sm:$0xff]
    %v282 = vlaneseq
    %v283 = vshrl.u32 %v282, 7
    %v284 = vsub.s32 0, %v283
    %v285 = vrot.slane %v278, %v284
    %v286 = vlaneseq
    %v287 = vshrl.u32 %v286, 7
    %v288 = vsub.s32 1, %v287
    %v289 = vrot.slane %v278, %v288
    %v290 = vlaneseq
    %v291 = vshrl.u32 %v290, 7
    %v292 = vsub.s32 2, %v291
    %v293 = vrot.slane %v278, %v292
    %v294 = vlaneseq
    %v295 = vshrl.u32 %v294, 7
    %v296 = vsub.s32 3, %v295
    %v297 = vrot.slane %v278, %v296
    %v298 = vlaneseq
    %v299 = vshrl.u32 %v298, 7
    %v300 = vsub.s32 4, %v299
    %v301 = vrot.slane %v278, %v300
    %v302 = vlaneseq
    %v303 = vshrl.u32 %v302, 7
    %v304 = vsub.s32 5, %v303
    %v305 = vrot.slane %v278, %v304
    %v306 = vlaneseq
    %v307 = vshrl.u32 %v306, 7
    %v308 = vsub.s32 6, %v307
    %v309 = vrot.slane %v278, %v308
    %v310 = vlaneseq
    %v311 = vshrl.u32 %v310, 7
    %v312 = vsub.s32 7, %v311
    %v313 = vrot.slane %v278, %v312
    %v314 = vlaneseq
    %v315 = vshrl.u32 %v314, 7
    %v316 = vsub.s32 0, %v315
    %v317 = vrot.slane %v279, %v316
    %v318 = vlaneseq
    %v319 = vshrl.u32 %v318, 7
    %v320 = vsub.s32 1, %v319
    %v321 = vrot.slane %v279, %v320
    %v322 = vlaneseq
    %v323 = vshrl.u32 %v322, 7
    %v324 = vsub.s32 2, %v323
    %v325 = vrot.slane %v279, %v324
    %v326 = vlaneseq
    %v327 = vshrl.u32 %v326, 7
    %v328 = vsub.s32 3, %v327
    %v329 = vrot.slane %v279, %v328
    %v330 = vlaneseq
    %v331 = vshrl.u32 %v330, 7
    %v332 = vsub.s32 4, %v331
    %v333 = vrot.slane %v279, %v332
    %v334 = vlaneseq
    %v335 = vshrl.u32 %v334, 7
    %v336 = vsub.s32 5, %v335
    %v337 = vrot.slane %v279, %v336
    %v338 = vlaneseq
    %v339 = vshrl.u32 %v338, 7
    %v340 = vsub.s32 6, %v339
    %v341 = vrot.slane %v279, %v340
    %v342 = vlaneseq
    %v343 = vshrl.u32 %v342, 7
    %v344 = vsub.s32 7, %v343
    %v345 = vrot.slane %v279, %v344
    %362 = vmatprep.subr.mxu0 %v23
    %363 = vmatpush1.msra.mxu0 %v22
    %364 = vmatprep.subr.mxu0 %v39
    %365 = vmatpush1.msra.mxu0 %v38
    %366 = vmatprep.subr.mxu0 %v55
    %367 = vmatpush1.msra.mxu0 %v54
    %368 = vmatprep.subr.mxu0 %v71
    %369 = vmatpush1.msra.mxu0 %v70
    %370 = vmatprep.subr.mxu0 %v87
    %371 = vmatpush1.msra.mxu0 %v86
    %372 = vmatprep.subr.mxu0 %v103
    %373 = vmatpush1.msra.mxu0 %v102
    %374 = vmatprep.subr.mxu0 %v119
    %375 = vmatpush1.msra.mxu0 %v118
    %376 = vmatprep.subr.mxu0 %v135
    %377 = vmatpush1.msra.mxu0 %v134
    %378 = vmatprep.subr.mxu0 %v151
    %379 = vmatpush1.msra.mxu0 %v150
    %380 = vmatprep.subr.mxu0 %v167
    %381 = vmatpush1.msra.mxu0 %v166
    %382 = vmatprep.subr.mxu0 %v183
    %383 = vmatpush1.msra.mxu0 %v182
    %384 = vmatprep.subr.mxu0 %v199
    %385 = vmatpush1.msra.mxu0 %v198
    %386 = vmatprep.subr.mxu0 %v215
    %387 = vmatpush1.msra.mxu0 %v214
    %388 = vmatprep.subr.mxu0 %v231
    %389 = vmatpush1.msra.mxu0 %v230
    %390 = vmatprep.subr.mxu0 %v247
    %391 = vmatpush1.msra.mxu0 %v246
    %392 = vmatprep.subr.mxu0 %v263
    %393 = vmatpush1.msra.mxu0 %v262
    %394 = vmatprep.subr.mxu0 0.0
    %395 = vmatpush1.msra.mxu0 0.0
    %396 = vmatprep.subr.mxu0 0.0
    %397 = vmatpush1.msra.mxu0 0.0
    %398 = vmatprep.subr.mxu0 0.0
    %399 = vmatpush1.msra.mxu0 0.0
    %400 = vmatprep.subr.mxu0 0.0
    %401 = vmatpush1.msra.mxu0 0.0
    %402 = vmatprep.subr.mxu0 0.0
    %403 = vmatpush1.msra.mxu0 0.0
    %404 = vmatprep.subr.mxu0 0.0
    %405 = vmatpush1.msra.mxu0 0.0
    %406 = vmatprep.subr.mxu0 0.0
    %407 = vmatpush1.msra.mxu0 0.0
    %408 = vmatprep.subr.mxu0 0.0
    %409 = vmatpush1.msra.mxu0 0.0
    %410 = vmatprep.subr.mxu0 0.0
    %411 = vmatpush1.msra.mxu0 0.0
    %412 = vmatprep.subr.mxu0 0.0
    %413 = vmatpush1.msra.mxu0 0.0
    %414 = vmatprep.subr.mxu0 0.0
    %415 = vmatpush1.msra.mxu0 0.0
    %416 = vmatprep.subr.mxu0 0.0
    %417 = vmatpush1.msra.mxu0 0.0
    %418 = vmatprep.subr.mxu0 0.0
    %419 = vmatpush1.msra.mxu0 0.0
    %420 = vmatprep.subr.mxu0 0.0
    %421 = vmatpush1.msra.mxu0 0.0
    %422 = vmatprep.subr.mxu0 0.0
    %423 = vmatpush1.msra.mxu0 0.0
    %424 = vmatprep.subr.mxu0 0.0
    %425 = vmatpush1.msra.mxu0 0.0
    %426 = vmatprep.mubr.f32.mxu0 0.0
    %427 = vmatmul.mubr.f32.gmra.mrb[0].mxu0 %v21
    %v428 = vpop.f32.mrb[0].mxu0
    %v429 = vadd.f32 %v285, %v428
    %v430 = vpop.f32.mrb[0].mxu0
    %v431 = vadd.f32 %v289, %v430
    %432 = vdwg.mxu0
    %433 = vmatprep.subr.mxu0 %v25
    %434 = vmatpush1.msra.mxu0 %v24
    %435 = vmatprep.subr.mxu0 %v41
    %436 = vmatpush1.msra.mxu0 %v40
    %437 = vmatprep.subr.mxu0 %v57
    %438 = vmatpush1.msra.mxu0 %v56
    %439 = vmatprep.subr.mxu0 %v73
    %440 = vmatpush1.msra.mxu0 %v72
    %441 = vmatprep.subr.mxu0 %v89
    %442 = vmatpush1.msra.mxu0 %v88
    %443 = vmatprep.subr.mxu0 %v105
    %444 = vmatpush1.msra.mxu0 %v104
    %445 = vmatprep.subr.mxu0 %v121
    %446 = vmatpush1.msra.mxu0 %v120
    %447 = vmatprep.subr.mxu0 %v137
    %448 = vmatpush1.msra.mxu0 %v136
    %449 = vmatprep.subr.mxu0 %v153
    %450 = vmatpush1.msra.mxu0 %v152
    %451 = vmatprep.subr.mxu0 %v169
    %452 = vmatpush1.msra.mxu0 %v168
    %453 = vmatprep.subr.mxu0 %v185
    %454 = vmatpush1.msra.mxu0 %v184
    %455 = vmatprep.subr.mxu0 %v201
    %456 = vmatpush1.msra.mxu0 %v200
    %457 = vmatprep.subr.mxu0 %v217
    %458 = vmatpush1.msra.mxu0 %v216
    %459 = vmatprep.subr.mxu0 %v233
    %460 = vmatpush1.msra.mxu0 %v232
    %461 = vmatprep.subr.mxu0 %v249
    %462 = vmatpush1.msra.mxu0 %v248
    %463 = vmatprep.subr.mxu0 %v265
    %464 = vmatpush1.msra.mxu0 %v264
    %465 = vmatprep.subr.mxu0 0.0
    %466 = vmatpush1.msra.mxu0 0.0
    %467 = vmatprep.subr.mxu0 0.0
    %468 = vmatpush1.msra.mxu0 0.0
    %469 = vmatprep.subr.mxu0 0.0
    %470 = vmatpush1.msra.mxu0 0.0
    %471 = vmatprep.subr.mxu0 0.0
    %472 = vmatpush1.msra.mxu0 0.0
    %473 = vmatprep.subr.mxu0 0.0
    %474 = vmatpush1.msra.mxu0 0.0
    %475 = vmatprep.subr.mxu0 0.0
    %476 = vmatpush1.msra.mxu0 0.0
    %477 = vmatprep.subr.mxu0 0.0
    %478 = vmatpush1.msra.mxu0 0.0
    %479 = vmatprep.subr.mxu0 0.0
    %480 = vmatpush1.msra.mxu0 0.0
    %481 = vmatprep.subr.mxu0 0.0
    %482 = vmatpush1.msra.mxu0 0.0
    %483 = vmatprep.subr.mxu0 0.0
    %484 = vmatpush1.msra.mxu0 0.0
    %485 = vmatprep.subr.mxu0 0.0
    %486 = vmatpush1.msra.mxu0 0.0
    %487 = vmatprep.subr.mxu0 0.0
    %488 = vmatpush1.msra.mxu0 0.0
    %489 = vmatprep.subr.mxu0 0.0
    %490 = vmatpush1.msra.mxu0 0.0
    %491 = vmatprep.subr.mxu0 0.0
    %492 = vmatpush1.msra.mxu0 0.0
    %493 = vmatprep.subr.mxu0 0.0
    %494 = vmatpush1.msra.mxu0 0.0
    %495 = vmatprep.subr.mxu0 0.0
    %496 = vmatpush1.msra.mxu0 0.0
    %497 = vmatprep.mubr.f32.mxu0 0.0
    %498 = vmatmul.mubr.f32.gmra.mrb[0].mxu0 %v21
    %v499 = vpop.f32.mrb[0].mxu0
    %v500 = vadd.f32 %v293, %v499
    %v501 = vpop.f32.mrb[0].mxu0
    %v502 = vadd.f32 %v297, %v501
    %503 = vdwg.mxu0
    %504 = vmatprep.subr.mxu0 %v27
    %505 = vmatpush1.msra.mxu0 %v26
    %506 = vmatprep.subr.mxu0 %v43
    %507 = vmatpush1.msra.mxu0 %v42
    %508 = vmatprep.subr.mxu0 %v59
    %509 = vmatpush1.msra.mxu0 %v58
    %510 = vmatprep.subr.mxu0 %v75
    %511 = vmatpush1.msra.mxu0 %v74
    %512 = vmatprep.subr.mxu0 %v91
    %513 = vmatpush1.msra.mxu0 %v90
    %514 = vmatprep.subr.mxu0 %v107
    %515 = vmatpush1.msra.mxu0 %v106
    %516 = vmatprep.subr.mxu0 %v123
    %517 = vmatpush1.msra.mxu0 %v122
    %518 = vmatprep.subr.mxu0 %v139
    %519 = vmatpush1.msra.mxu0 %v138
    %520 = vmatprep.subr.mxu0 %v155
    %521 = vmatpush1.msra.mxu0 %v154
    %522 = vmatprep.subr.mxu0 %v171
    %523 = vmatpush1.msra.mxu0 %v170
    %524 = vmatprep.subr.mxu0 %v187
    %525 = vmatpush1.msra.mxu0 %v186
    %526 = vmatprep.subr.mxu0 %v203
    %527 = vmatpush1.msra.mxu0 %v202
    %528 = vmatprep.subr.mxu0 %v219
    %529 = vmatpush1.msra.mxu0 %v218
    %530 = vmatprep.subr.mxu0 %v235
    %531 = vmatpush1.msra.mxu0 %v234
    %532 = vmatprep.subr.mxu0 %v251
    %533 = vmatpush1.msra.mxu0 %v250
    %534 = vmatprep.subr.mxu0 %v267
    %535 = vmatpush1.msra.mxu0 %v266
    %536 = vmatprep.subr.mxu0 0.0
    %537 = vmatpush1.msra.mxu0 0.0
    %538 = vmatprep.subr.mxu0 0.0
    %539 = vmatpush1.msra.mxu0 0.0
    %540 = vmatprep.subr.mxu0 0.0
    %541 = vmatpush1.msra.mxu0 0.0
    %542 = vmatprep.subr.mxu0 0.0
    %543 = vmatpush1.msra.mxu0 0.0
    %544 = vmatprep.subr.mxu0 0.0
    %545 = vmatpush1.msra.mxu0 0.0
    %546 = vmatprep.subr.mxu0 0.0
    %547 = vmatpush1.msra.mxu0 0.0
    %548 = vmatprep.subr.mxu0 0.0
    %549 = vmatpush1.msra.mxu0 0.0
    %550 = vmatprep.subr.mxu0 0.0
    %551 = vmatpush1.msra.mxu0 0.0
    %552 = vmatprep.subr.mxu0 0.0
    %553 = vmatpush1.msra.mxu0 0.0
    %554 = vmatprep.subr.mxu0 0.0
    %555 = vmatpush1.msra.mxu0 0.0
    %556 = vmatprep.subr.mxu0 0.0
    %557 = vmatpush1.msra.mxu0 0.0
    %558 = vmatprep.subr.mxu0 0.0
    %559 = vmatpush1.msra.mxu0 0.0
    %560 = vmatprep.subr.mxu0 0.0
    %561 = vmatpush1.msra.mxu0 0.0
    %562 = vmatprep.subr.mxu0 0.0
    %563 = vmatpush1.msra.mxu0 0.0
    %564 = vmatprep.subr.mxu0 0.0
    %565 = vmatpush1.msra.mxu0 0.0
    %566 = vmatprep.subr.mxu0 0.0
    %567 = vmatpush1.msra.mxu0 0.0
    %568 = vmatprep.mubr.f32.mxu0 0.0
    %569 = vmatmul.mubr.f32.gmra.mrb[0].mxu0 %v21
    %v570 = vpop.f32.mrb[0].mxu0
    %v571 = vadd.f32 %v301, %v570
    %v572 = vpop.f32.mrb[0].mxu0
    %v573 = vadd.f32 %v305, %v572
    %574 = vdwg.mxu0
    %575 = vmatprep.subr.mxu0 %v29
    %576 = vmatpush1.msra.mxu0 %v28
    %577 = vmatprep.subr.mxu0 %v45
    %578 = vmatpush1.msra.mxu0 %v44
    %579 = vmatprep.subr.mxu0 %v61
    %580 = vmatpush1.msra.mxu0 %v60
    %581 = vmatprep.subr.mxu0 %v77
    %582 = vmatpush1.msra.mxu0 %v76
    %583 = vmatprep.subr.mxu0 %v93
    %584 = vmatpush1.msra.mxu0 %v92
    %585 = vmatprep.subr.mxu0 %v109
    %586 = vmatpush1.msra.mxu0 %v108
    %587 = vmatprep.subr.mxu0 %v125
    %588 = vmatpush1.msra.mxu0 %v124
    %589 = vmatprep.subr.mxu0 %v141
    %590 = vmatpush1.msra.mxu0 %v140
    %591 = vmatprep.subr.mxu0 %v157
    %592 = vmatpush1.msra.mxu0 %v156
    %593 = vmatprep.subr.mxu0 %v173
    %594 = vmatpush1.msra.mxu0 %v172
    %595 = vmatprep.subr.mxu0 %v189
    %596 = vmatpush1.msra.mxu0 %v188
    %597 = vmatprep.subr.mxu0 %v205
    %598 = vmatpush1.msra.mxu0 %v204
    %599 = vmatprep.subr.mxu0 %v221
    %600 = vmatpush1.msra.mxu0 %v220
    %601 = vmatprep.subr.mxu0 %v237
    %602 = vmatpush1.msra.mxu0 %v236
    %603 = vmatprep.subr.mxu0 %v253
    %604 = vmatpush1.msra.mxu0 %v252
    %605 = vmatprep.subr.mxu0 %v269
    %606 = vmatpush1.msra.mxu0 %v268
    %607 = vmatprep.subr.mxu0 0.0
    %608 = vmatpush1.msra.mxu0 0.0
    %609 = vmatprep.subr.mxu0 0.0
    %610 = vmatpush1.msra.mxu0 0.0
    %611 = vmatprep.subr.mxu0 0.0
    %612 = vmatpush1.msra.mxu0 0.0
    %613 = vmatprep.subr.mxu0 0.0
    %614 = vmatpush1.msra.mxu0 0.0
    %615 = vmatprep.subr.mxu0 0.0
    %616 = vmatpush1.msra.mxu0 0.0
    %617 = vmatprep.subr.mxu0 0.0
    %618 = vmatpush1.msra.mxu0 0.0
    %619 = vmatprep.subr.mxu0 0.0
    %620 = vmatpush1.msra.mxu0 0.0
    %621 = vmatprep.subr.mxu0 0.0
    %622 = vmatpush1.msra.mxu0 0.0
    %623 = vmatprep.subr.mxu0 0.0
    %624 = vmatpush1.msra.mxu0 0.0
    %625 = vmatprep.subr.mxu0 0.0
    %626 = vmatpush1.msra.mxu0 0.0
    %627 = vmatprep.subr.mxu0 0.0
    %628 = vmatpush1.msra.mxu0 0.0
    %629 = vmatprep.subr.mxu0 0.0
    %630 = vmatpush1.msra.mxu0 0.0
    %631 = vmatprep.subr.mxu0 0.0
    %632 = vmatpush1.msra.mxu0 0.0
    %633 = vmatprep.subr.mxu0 0.0
    %634 = vmatpush1.msra.mxu0 0.0
    %635 = vmatprep.subr.mxu0 0.0
    %636 = vmatpush1.msra.mxu0 0.0
    %637 = vmatprep.subr.mxu0 0.0
    %638 = vmatpush1.msra.mxu0 0.0
    %639 = vmatprep.mubr.f32.mxu0 0.0
    %640 = vmatmul.mubr.f32.gmra.mrb[0].mxu0 %v21
    %v641 = vpop.f32.mrb[0].mxu0
    %v642 = vadd.f32 %v309, %v641
    %v643 = vpop.f32.mrb[0].mxu0
    %v644 = vadd.f32 %v313, %v643
    %645 = vdwg.mxu0
    %646 = vmatprep.subr.mxu0 %v31
    %647 = vmatpush1.msra.mxu0 %v30
    %648 = vmatprep.subr.mxu0 %v47
    %649 = vmatpush1.msra.mxu0 %v46
    %650 = vmatprep.subr.mxu0 %v63
    %651 = vmatpush1.msra.mxu0 %v62
    %652 = vmatprep.subr.mxu0 %v79
    %653 = vmatpush1.msra.mxu0 %v78
    %654 = vmatprep.subr.mxu0 %v95
    %655 = vmatpush1.msra.mxu0 %v94
    %656 = vmatprep.subr.mxu0 %v111
    %657 = vmatpush1.msra.mxu0 %v110
    %658 = vmatprep.subr.mxu0 %v127
    %659 = vmatpush1.msra.mxu0 %v126
    %660 = vmatprep.subr.mxu0 %v143
    %661 = vmatpush1.msra.mxu0 %v142
    %662 = vmatprep.subr.mxu0 %v159
    %663 = vmatpush1.msra.mxu0 %v158
    %664 = vmatprep.subr.mxu0 %v175
    %665 = vmatpush1.msra.mxu0 %v174
    %666 = vmatprep.subr.mxu0 %v191
    %667 = vmatpush1.msra.mxu0 %v190
    %668 = vmatprep.subr.mxu0 %v207
    %669 = vmatpush1.msra.mxu0 %v206
    %670 = vmatprep.subr.mxu0 %v223
    %671 = vmatpush1.msra.mxu0 %v222
    %672 = vmatprep.subr.mxu0 %v239
    %673 = vmatpush1.msra.mxu0 %v238
    %674 = vmatprep.subr.mxu0 %v255
    %675 = vmatpush1.msra.mxu0 %v254
    %676 = vmatprep.subr.mxu0 %v271
    %677 = vmatpush1.msra.mxu0 %v270
    %678 = vmatprep.subr.mxu0 0.0
    %679 = vmatpush1.msra.mxu0 0.0
    %680 = vmatprep.subr.mxu0 0.0
    %681 = vmatpush1.msra.mxu0 0.0
    %682 = vmatprep.subr.mxu0 0.0
    %683 = vmatpush1.msra.mxu0 0.0
    %684 = vmatprep.subr.mxu0 0.0
    %685 = vmatpush1.msra.mxu0 0.0
    %686 = vmatprep.subr.mxu0 0.0
    %687 = vmatpush1.msra.mxu0 0.0
    %688 = vmatprep.subr.mxu0 0.0
    %689 = vmatpush1.msra.mxu0 0.0
    %690 = vmatprep.subr.mxu0 0.0
    %691 = vmatpush1.msra.mxu0 0.0
    %692 = vmatprep.subr.mxu0 0.0
    %693 = vmatpush1.msra.mxu0 0.0
    %694 = vmatprep.subr.mxu0 0.0
    %695 = vmatpush1.msra.mxu0 0.0
    %696 = vmatprep.subr.mxu0 0.0
    %697 = vmatpush1.msra.mxu0 0.0
    %698 = vmatprep.subr.mxu0 0.0
    %699 = vmatpush1.msra.mxu0 0.0
    %700 = vmatprep.subr.mxu0 0.0
    %701 = vmatpush1.msra.mxu0 0.0
    %702 = vmatprep.subr.mxu0 0.0
    %703 = vmatpush1.msra.mxu0 0.0
    %704 = vmatprep.subr.mxu0 0.0
    %705 = vmatpush1.msra.mxu0 0.0
    %706 = vmatprep.subr.mxu0 0.0
    %707 = vmatpush1.msra.mxu0 0.0
    %708 = vmatprep.subr.mxu0 0.0
    %709 = vmatpush1.msra.mxu0 0.0
    %710 = vmatprep.mubr.f32.mxu0 0.0
    %711 = vmatmul.mubr.f32.gmra.mrb[0].mxu0 %v21
    %v712 = vpop.f32.mrb[0].mxu0
    %v713 = vadd.f32 %v317, %v712
    %v714 = vpop.f32.mrb[0].mxu0
    %v715 = vadd.f32 %v321, %v714
    %716 = vdwg.mxu0
    %717 = vmatprep.subr.mxu0 %v33
    %718 = vmatpush1.msra.mxu0 %v32
    %719 = vmatprep.subr.mxu0 %v49
    %720 = vmatpush1.msra.mxu0 %v48
    %721 = vmatprep.subr.mxu0 %v65
    %722 = vmatpush1.msra.mxu0 %v64
    %723 = vmatprep.subr.mxu0 %v81
    %724 = vmatpush1.msra.mxu0 %v80
    %725 = vmatprep.subr.mxu0 %v97
    %726 = vmatpush1.msra.mxu0 %v96
    %727 = vmatprep.subr.mxu0 %v113
    %728 = vmatpush1.msra.mxu0 %v112
    %729 = vmatprep.subr.mxu0 %v129
    %730 = vmatpush1.msra.mxu0 %v128
    %731 = vmatprep.subr.mxu0 %v145
    %732 = vmatpush1.msra.mxu0 %v144
    %733 = vmatprep.subr.mxu0 %v161
    %734 = vmatpush1.msra.mxu0 %v160
    %735 = vmatprep.subr.mxu0 %v177
    %736 = vmatpush1.msra.mxu0 %v176
    %737 = vmatprep.subr.mxu0 %v193
    %738 = vmatpush1.msra.mxu0 %v192
    %739 = vmatprep.subr.mxu0 %v209
    %740 = vmatpush1.msra.mxu0 %v208
    %741 = vmatprep.subr.mxu0 %v225
    %742 = vmatpush1.msra.mxu0 %v224
    %743 = vmatprep.subr.mxu0 %v241
    %744 = vmatpush1.msra.mxu0 %v240
    %745 = vmatprep.subr.mxu0 %v257
    %746 = vmatpush1.msra.mxu0 %v256
    %747 = vmatprep.subr.mxu0 %v273
    %748 = vmatpush1.msra.mxu0 %v272
    %749 = vmatprep.subr.mxu0 0.0
    %750 = vmatpush1.msra.mxu0 0.0
    %751 = vmatprep.subr.mxu0 0.0
    %752 = vmatpush1.msra.mxu0 0.0
    %753 = vmatprep.subr.mxu0 0.0
    %754 = vmatpush1.msra.mxu0 0.0
    %755 = vmatprep.subr.mxu0 0.0
    %756 = vmatpush1.msra.mxu0 0.0
    %757 = vmatprep.subr.mxu0 0.0
    %758 = vmatpush1.msra.mxu0 0.0
    %759 = vmatprep.subr.mxu0 0.0
    %760 = vmatpush1.msra.mxu0 0.0
    %761 = vmatprep.subr.mxu0 0.0
    %762 = vmatpush1.msra.mxu0 0.0
    %763 = vmatprep.subr.mxu0 0.0
    %764 = vmatpush1.msra.mxu0 0.0
    %765 = vmatprep.subr.mxu0 0.0
    %766 = vmatpush1.msra.mxu0 0.0
    %767 = vmatprep.subr.mxu0 0.0
    %768 = vmatpush1.msra.mxu0 0.0
    %769 = vmatprep.subr.mxu0 0.0
    %770 = vmatpush1.msra.mxu0 0.0
    %771 = vmatprep.subr.mxu0 0.0
    %772 = vmatpush1.msra.mxu0 0.0
    %773 = vmatprep.subr.mxu0 0.0
    %774 = vmatpush1.msra.mxu0 0.0
    %775 = vmatprep.subr.mxu0 0.0
    %776 = vmatpush1.msra.mxu0 0.0
    %777 = vmatprep.subr.mxu0 0.0
    %778 = vmatpush1.msra.mxu0 0.0
    %779 = vmatprep.subr.mxu0 0.0
    %780 = vmatpush1.msra.mxu0 0.0
    %781 = vmatprep.mubr.f32.mxu0 0.0
    %782 = vmatmul.mubr.f32.gmra.mrb[0].mxu0 %v21
    %v783 = vpop.f32.mrb[0].mxu0
    %v784 = vadd.f32 %v325, %v783
    %v785 = vpop.f32.mrb[0].mxu0
    %v786 = vadd.f32 %v329, %v785
    %787 = vdwg.mxu0
    %788 = vmatprep.subr.mxu0 %v35
    %789 = vmatpush1.msra.mxu0 %v34
    %790 = vmatprep.subr.mxu0 %v51
    %791 = vmatpush1.msra.mxu0 %v50
    %792 = vmatprep.subr.mxu0 %v67
    %793 = vmatpush1.msra.mxu0 %v66
    %794 = vmatprep.subr.mxu0 %v83
    %795 = vmatpush1.msra.mxu0 %v82
    %796 = vmatprep.subr.mxu0 %v99
    %797 = vmatpush1.msra.mxu0 %v98
    %798 = vmatprep.subr.mxu0 %v115
    %799 = vmatpush1.msra.mxu0 %v114
    %800 = vmatprep.subr.mxu0 %v131
    %801 = vmatpush1.msra.mxu0 %v130
    %802 = vmatprep.subr.mxu0 %v147
    %803 = vmatpush1.msra.mxu0 %v146
    %804 = vmatprep.subr.mxu0 %v163
    %805 = vmatpush1.msra.mxu0 %v162
    %806 = vmatprep.subr.mxu0 %v179
    %807 = vmatpush1.msra.mxu0 %v178
    %808 = vmatprep.subr.mxu0 %v195
    %809 = vmatpush1.msra.mxu0 %v194
    %810 = vmatprep.subr.mxu0 %v211
    %811 = vmatpush1.msra.mxu0 %v210
    %812 = vmatprep.subr.mxu0 %v227
    %813 = vmatpush1.msra.mxu0 %v226
    %814 = vmatprep.subr.mxu0 %v243
    %815 = vmatpush1.msra.mxu0 %v242
    %816 = vmatprep.subr.mxu0 %v259
    %817 = vmatpush1.msra.mxu0 %v258
    %818 = vmatprep.subr.mxu0 %v275
    %819 = vmatpush1.msra.mxu0 %v274
    %820 = vmatprep.subr.mxu0 0.0
    %821 = vmatpush1.msra.mxu0 0.0
    %822 = vmatprep.subr.mxu0 0.0
    %823 = vmatpush1.msra.mxu0 0.0
    %824 = vmatprep.subr.mxu0 0.0
    %825 = vmatpush1.msra.mxu0 0.0
    %826 = vmatprep.subr.mxu0 0.0
    %827 = vmatpush1.msra.mxu0 0.0
    %828 = vmatprep.subr.mxu0 0.0
    %829 = vmatpush1.msra.mxu0 0.0
    %830 = vmatprep.subr.mxu0 0.0
    %831 = vmatpush1.msra.mxu0 0.0
    %832 = vmatprep.subr.mxu0 0.0
    %833 = vmatpush1.msra.mxu0 0.0
    %834 = vmatprep.subr.mxu0 0.0
    %835 = vmatpush1.msra.mxu0 0.0
    %836 = vmatprep.subr.mxu0 0.0
    %837 = vmatpush1.msra.mxu0 0.0
    %838 = vmatprep.subr.mxu0 0.0
    %839 = vmatpush1.msra.mxu0 0.0
    %840 = vmatprep.subr.mxu0 0.0
    %841 = vmatpush1.msra.mxu0 0.0
    %842 = vmatprep.subr.mxu0 0.0
    %843 = vmatpush1.msra.mxu0 0.0
    %844 = vmatprep.subr.mxu0 0.0
    %845 = vmatpush1.msra.mxu0 0.0
    %846 = vmatprep.subr.mxu0 0.0
    %847 = vmatpush1.msra.mxu0 0.0
    %848 = vmatprep.subr.mxu0 0.0
    %849 = vmatpush1.msra.mxu0 0.0
    %850 = vmatprep.subr.mxu0 0.0
    %851 = vmatpush1.msra.mxu0 0.0
    %852 = vmatprep.mubr.f32.mxu0 0.0
    %853 = vmatmul.mubr.f32.gmra.mrb[0].mxu0 %v21
    %v854 = vpop.f32.mrb[0].mxu0
    %v855 = vadd.f32 %v333, %v854
    %v856 = vpop.f32.mrb[0].mxu0
    %v857 = vadd.f32 %v337, %v856
    %858 = vdwg.mxu0
    %859 = vmatprep.subr.mxu0 %v37
    %860 = vmatpush1.msra.mxu0 %v36
    %861 = vmatprep.subr.mxu0 %v53
    %862 = vmatpush1.msra.mxu0 %v52
    %863 = vmatprep.subr.mxu0 %v69
    %864 = vmatpush1.msra.mxu0 %v68
    %865 = vmatprep.subr.mxu0 %v85
    %866 = vmatpush1.msra.mxu0 %v84
    %867 = vmatprep.subr.mxu0 %v101
    %868 = vmatpush1.msra.mxu0 %v100
    %869 = vmatprep.subr.mxu0 %v117
    %870 = vmatpush1.msra.mxu0 %v116
    %871 = vmatprep.subr.mxu0 %v133
    %872 = vmatpush1.msra.mxu0 %v132
    %873 = vmatprep.subr.mxu0 %v149
    %874 = vmatpush1.msra.mxu0 %v148
    %875 = vmatprep.subr.mxu0 %v165
    %876 = vmatpush1.msra.mxu0 %v164
    %877 = vmatprep.subr.mxu0 %v181
    %878 = vmatpush1.msra.mxu0 %v180
    %879 = vmatprep.subr.mxu0 %v197
    %880 = vmatpush1.msra.mxu0 %v196
    %881 = vmatprep.subr.mxu0 %v213
    %882 = vmatpush1.msra.mxu0 %v212
    %883 = vmatprep.subr.mxu0 %v229
    %884 = vmatpush1.msra.mxu0 %v228
    %885 = vmatprep.subr.mxu0 %v245
    %886 = vmatpush1.msra.mxu0 %v244
    %887 = vmatprep.subr.mxu0 %v261
    %888 = vmatpush1.msra.mxu0 %v260
    %889 = vmatprep.subr.mxu0 %v277
    %890 = vmatpush1.msra.mxu0 %v276
    %891 = vmatprep.subr.mxu0 0.0
    %892 = vmatpush1.msra.mxu0 0.0
    %893 = vmatprep.subr.mxu0 0.0
    %894 = vmatpush1.msra.mxu0 0.0
    %895 = vmatprep.subr.mxu0 0.0
    %896 = vmatpush1.msra.mxu0 0.0
    %897 = vmatprep.subr.mxu0 0.0
    %898 = vmatpush1.msra.mxu0 0.0
    %899 = vmatprep.subr.mxu0 0.0
    %900 = vmatpush1.msra.mxu0 0.0
    %901 = vmatprep.subr.mxu0 0.0
    %902 = vmatpush1.msra.mxu0 0.0
    %903 = vmatprep.subr.mxu0 0.0
    %904 = vmatpush1.msra.mxu0 0.0
    %905 = vmatprep.subr.mxu0 0.0
    %906 = vmatpush1.msra.mxu0 0.0
    %907 = vmatprep.subr.mxu0 0.0
    %908 = vmatpush1.msra.mxu0 0.0
    %909 = vmatprep.subr.mxu0 0.0
    %910 = vmatpush1.msra.mxu0 0.0
    %911 = vmatprep.subr.mxu0 0.0
    %912 = vmatpush1.msra.mxu0 0.0
    %913 = vmatprep.subr.mxu0 0.0
    %914 = vmatpush1.msra.mxu0 0.0
    %915 = vmatprep.subr.mxu0 0.0
    %916 = vmatpush1.msra.mxu0 0.0
    %917 = vmatprep.subr.mxu0 0.0
    %918 = vmatpush1.msra.mxu0 0.0
    %919 = vmatprep.subr.mxu0 0.0
    %920 = vmatpush1.msra.mxu0 0.0
    %921 = vmatprep.subr.mxu0 0.0
    %922 = vmatpush1.msra.mxu0 0.0
    %923 = vmatprep.mubr.f32.mxu0 0.0
    %924 = vmatmul.mubr.f32.gmra.mrb[0].mxu0 %v21
    %v925 = vpop.f32.mrb[0].mxu0
    %v926 = vadd.f32 %v341, %v925
    %v927 = vpop.f32.mrb[0].mxu0
    %v928 = vadd.f32 %v345, %v927
    %929 = vdwg.mxu0
    %v930 = vtanh.pop %v429
    %v931 = vtanh.pop %v431
    %v932 = vtanh.pop %v500
    %v933 = vtanh.pop %v502
    %v934 = vtanh.pop %v571
    %v935 = vtanh.pop %v573
    %v936 = vtanh.pop %v642
    %v937 = vtanh.pop %v644
    %v938 = vtanh.pop %v713
    %v939 = vtanh.pop %v715
    %v940 = vtanh.pop %v784
    %v941 = vtanh.pop %v786
    %v942 = vtanh.pop %v855
    %v943 = vtanh.pop %v857
    %v944 = vtanh.pop %v926
    %v945 = vtanh.pop %v928
    %v946 = vld [vmem:[%s3] sm:$0xff]
    %v947 = vld [vmem:[%s3 + $0x8] sm:$0xff]
    %v948 = vld [vmem:[%s3 + $0x10] sm:$0xff]
    %v949 = vld [vmem:[%s3 + $0x18] sm:$0xff]
    %v950 = vld [vmem:[%s3 + $0x20] sm:$0xff]
    %v951 = vld [vmem:[%s3 + $0x28] sm:$0xff]
    %v952 = vld [vmem:[%s3 + $0x30] sm:$0xff]
    %v953 = vld [vmem:[%s3 + $0x38] sm:$0xff]
    %v954 = vld [vmem:[%s3 + $0x40] sm:$0xff]
    %v955 = vld [vmem:[%s3 + $0x48] sm:$0xff]
    %v956 = vld [vmem:[%s3 + $0x50] sm:$0xff]
    %v957 = vld [vmem:[%s3 + $0x58] sm:$0xff]
    %v958 = vld [vmem:[%s3 + $0x60] sm:$0xff]
    %v959 = vld [vmem:[%s3 + $0x68] sm:$0xff]
    %v960 = vld [vmem:[%s3 + $0x70] sm:$0xff]
    %v961 = vld [vmem:[%s3 + $0x78] sm:$0xff]
    %v962 = vld [vmem:[%s3 + $0x80] sm:$0xff]
    %v963 = vld [vmem:[%s3 + $0x88] sm:$0xff]
    %v964 = vld [vmem:[%s3 + $0x90] sm:$0xff]
    %v965 = vld [vmem:[%s3 + $0x98] sm:$0xff]
    %v966 = vld [vmem:[%s3 + $0xa0] sm:$0xff]
    %v967 = vld [vmem:[%s3 + $0xa8] sm:$0xff]
    %v968 = vld [vmem:[%s3 + $0xb0] sm:$0xff]
    %v969 = vld [vmem:[%s3 + $0xb8] sm:$0xff]
    %v970 = vld [vmem:[%s3 + $0xc0] sm:$0xff]
    %v971 = vld [vmem:[%s3 + $0xc8] sm:$0xff]
    %v972 = vld [vmem:[%s3 + $0xd0] sm:$0xff]
    %v973 = vld [vmem:[%s3 + $0xd8] sm:$0xff]
    %v974 = vld [vmem:[%s3 + $0xe0] sm:$0xff]
    %v975 = vld [vmem:[%s3 + $0xe8] sm:$0xff]
    %v976 = vld [vmem:[%s3 + $0xf0] sm:$0xff]
    %v977 = vld [vmem:[%s3 + $0xf8] sm:$0xff]
    %v978 = vld [vmem:[%s3 + $0x100] sm:$0xff]
    %v979 = vld [vmem:[%s3 + $0x108] sm:$0xff]
    %v980 = vld [vmem:[%s3 + $0x110] sm:$0xff]
    %v981 = vld [vmem:[%s3 + $0x118] sm:$0xff]
    %v982 = vld [vmem:[%s3 + $0x120] sm:$0xff]
    %v983 = vld [vmem:[%s3 + $0x128] sm:$0xff]
    %v984 = vld [vmem:[%s3 + $0x130] sm:$0xff]
    %v985 = vld [vmem:[%s3 + $0x138] sm:$0xff]
    %v986 = vld [vmem:[%s3 + $0x140] sm:$0xff]
    %v987 = vld [vmem:[%s3 + $0x148] sm:$0xff]
    %v988 = vld [vmem:[%s3 + $0x150] sm:$0xff]
    %v989 = vld [vmem:[%s3 + $0x158] sm:$0xff]
    %v990 = vld [vmem:[%s3 + $0x160] sm:$0xff]
    %v991 = vld [vmem:[%s3 + $0x168] sm:$0xff]
    %v992 = vld [vmem:[%s3 + $0x170] sm:$0xff]
    %v993 = vld [vmem:[%s3 + $0x178] sm:$0xff]
    %v994 = vld [vmem:[%s3 + $0x180] sm:$0xff]
    %v995 = vld [vmem:[%s3 + $0x188] sm:$0xff]
    %v996 = vld [vmem:[%s3 + $0x190] sm:$0xff]
    %v997 = vld [vmem:[%s3 + $0x198] sm:$0xff]
    %v998 = vld [vmem:[%s3 + $0x1a0] sm:$0xff]
    %v999 = vld [vmem:[%s3 + $0x1a8] sm:$0xff]
    %v1000 = vld [vmem:[%s3 + $0x1b0] sm:$0xff]
    %v1001 = vld [vmem:[%s3 + $0x1b8] sm:$0xff]
    %v1002 = vld [vmem:[%s3 + $0x1c0] sm:$0xff]
    %v1003 = vld [vmem:[%s3 + $0x1c8] sm:$0xff]
    %v1004 = vld [vmem:[%s3 + $0x1d0] sm:$0xff]
    %v1005 = vld [vmem:[%s3 + $0x1d8] sm:$0xff]
    %v1006 = vld [vmem:[%s3 + $0x1e0] sm:$0xff]
    %v1007 = vld [vmem:[%s3 + $0x1e8] sm:$0xff]
    %v1008 = vld [vmem:[%s3 + $0x1f0] sm:$0xff]
    %v1009 = vld [vmem:[%s3 + $0x1f8] sm:$0xff]
    %v1010 = vld [vmem:[%s3 + $0x200] sm:$0xff]
    %v1011 = vld [vmem:[%s3 + $0x208] sm:$0xff]
    %v1012 = vld [vmem:[%s3 + $0x210] sm:$0xff]
    %v1013 = vld [vmem:[%s3 + $0x218] sm:$0xff]
    %v1014 = vld [vmem:[%s3 + $0x220] sm:$0xff]
    %v1015 = vld [vmem:[%s3 + $0x228] sm:$0xff]
    %v1016 = vld [vmem:[%s3 + $0x230] sm:$0xff]
    %v1017 = vld [vmem:[%s3 + $0x238] sm:$0xff]
    %v1018 = vld [vmem:[%s3 + $0x240] sm:$0xff]
    %v1019 = vld [vmem:[%s3 + $0x248] sm:$0xff]
    %v1020 = vld [vmem:[%s3 + $0x250] sm:$0xff]
    %v1021 = vld [vmem:[%s3 + $0x258] sm:$0xff]
    %v1022 = vld [vmem:[%s3 + $0x260] sm:$0xff]
    %v1023 = vld [vmem:[%s3 + $0x268] sm:$0xff]
    %v1024 = vld [vmem:[%s3 + $0x270] sm:$0xff]
    %v1025 = vld [vmem:[%s3 + $0x278] sm:$0xff]
    %v1026 = vld [vmem:[%s3 + $0x280] sm:$0xff]
    %v1027 = vld [vmem:[%s3 + $0x288] sm:$0xff]
    %v1028 = vld [vmem:[%s3 + $0x290] sm:$0xff]
    %v1029 = vld [vmem:[%s3 + $0x298] sm:$0xff]
    %v1030 = vld [vmem:[%s3 + $0x2a0] sm:$0xff]
    %v1031 = vld [vmem:[%s3 + $0x2a8] sm:$0xff]
    %v1032 = vld [vmem:[%s3 + $0x2b0] sm:$0xff]
    %v1033 = vld [vmem:[%s3 + $0x2b8] sm:$0xff]
    %v1034 = vld [vmem:[%s3 + $0x2c0] sm:$0xff]
    %v1035 = vld [vmem:[%s3 + $0x2c8] sm:$0xff]
    %v1036 = vld [vmem:[%s3 + $0x2d0] sm:$0xff]
    %v1037 = vld [vmem:[%s3 + $0x2d8] sm:$0xff]
    %v1038 = vld [vmem:[%s3 + $0x2e0] sm:$0xff]
    %v1039 = vld [vmem:[%s3 + $0x2e8] sm:$0xff]
    %v1040 = vld [vmem:[%s3 + $0x2f0] sm:$0xff]
    %v1041 = vld [vmem:[%s3 + $0x2f8] sm:$0xff]
    %v1042 = vld [vmem:[%s3 + $0x300] sm:$0xff]
    %v1043 = vld [vmem:[%s3 + $0x308] sm:$0xff]
    %v1044 = vld [vmem:[%s3 + $0x310] sm:$0xff]
    %v1045 = vld [vmem:[%s3 + $0x318] sm:$0xff]
    %v1046 = vld [vmem:[%s3 + $0x320] sm:$0xff]
    %v1047 = vld [vmem:[%s3 + $0x328] sm:$0xff]
    %v1048 = vld [vmem:[%s3 + $0x330] sm:$0xff]
    %v1049 = vld [vmem:[%s3 + $0x338] sm:$0xff]
    %v1050 = vld [vmem:[%s3 + $0x340] sm:$0xff]
    %v1051 = vld [vmem:[%s3 + $0x348] sm:$0xff]
    %v1052 = vld [vmem:[%s3 + $0x350] sm:$0xff]
    %v1053 = vld [vmem:[%s3 + $0x358] sm:$0xff]
    %v1054 = vld [vmem:[%s3 + $0x360] sm:$0xff]
    %v1055 = vld [vmem:[%s3 + $0x368] sm:$0xff]
    %v1056 = vld [vmem:[%s3 + $0x370] sm:$0xff]
    %v1057 = vld [vmem:[%s3 + $0x378] sm:$0xff]
    %v1058 = vld [vmem:[%s3 + $0x380] sm:$0xff]
    %v1059 = vld [vmem:[%s3 + $0x388] sm:$0xff]
    %v1060 = vld [vmem:[%s3 + $0x390] sm:$0xff]
    %v1061 = vld [vmem:[%s3 + $0x398] sm:$0xff]
    %v1062 = vld [vmem:[%s3 + $0x3a0] sm:$0xff]
    %v1063 = vld [vmem:[%s3 + $0x3a8] sm:$0xff]
    %v1064 = vld [vmem:[%s3 + $0x3b0] sm:$0xff]
    %v1065 = vld [vmem:[%s3 + $0x3b8] sm:$0xff]
    %v1066 = vld [vmem:[%s3 + $0x3c0] sm:$0xff]
    %v1067 = vld [vmem:[%s3 + $0x3c8] sm:$0xff]
    %v1068 = vld [vmem:[%s3 + $0x3d0] sm:$0xff]
    %v1069 = vld [vmem:[%s3 + $0x3d8] sm:$0xff]
    %v1070 = vld [vmem:[%s3 + $0x3e0] sm:$0xff]
    %v1071 = vld [vmem:[%s3 + $0x3e8] sm:$0xff]
    %v1072 = vld [vmem:[%s3 + $0x3f0] sm:$0xff]
    %v1073 = vld [vmem:[%s3 + $0x3f8] sm:$0xff]
    %v1074 = vld [vmem:[%s3 + $0x400] sm:$0xff]
    %v1075 = vld [vmem:[%s3 + $0x408] sm:$0xff]
    %v1076 = vld [vmem:[%s3 + $0x410] sm:$0xff]
    %v1077 = vld [vmem:[%s3 + $0x418] sm:$0xff]
    %v1078 = vld [vmem:[%s3 + $0x420] sm:$0xff]
    %v1079 = vld [vmem:[%s3 + $0x428] sm:$0xff]
    %v1080 = vld [vmem:[%s3 + $0x430] sm:$0xff]
    %v1081 = vld [vmem:[%s3 + $0x438] sm:$0xff]
    %v1082 = vld [vmem:[%s3 + $0x440] sm:$0xff]
    %v1083 = vld [vmem:[%s3 + $0x448] sm:$0xff]
    %v1084 = vld [vmem:[%s3 + $0x450] sm:$0xff]
    %v1085 = vld [vmem:[%s3 + $0x458] sm:$0xff]
    %v1086 = vld [vmem:[%s3 + $0x460] sm:$0xff]
    %v1087 = vld [vmem:[%s3 + $0x468] sm:$0xff]
    %v1088 = vld [vmem:[%s3 + $0x470] sm:$0xff]
    %v1089 = vld [vmem:[%s3 + $0x478] sm:$0xff]
    %v1090 = vld [vmem:[%s3 + $0x480] sm:$0xff]
    %v1091 = vld [vmem:[%s3 + $0x488] sm:$0xff]
    %v1092 = vld [vmem:[%s3 + $0x490] sm:$0xff]
    %v1093 = vld [vmem:[%s3 + $0x498] sm:$0xff]
    %v1094 = vld [vmem:[%s3 + $0x4a0] sm:$0xff]
    %v1095 = vld [vmem:[%s3 + $0x4a8] sm:$0xff]
    %v1096 = vld [vmem:[%s3 + $0x4b0] sm:$0xff]
    %v1097 = vld [vmem:[%s3 + $0x4b8] sm:$0xff]
    %v1098 = vld [vmem:[%s3 + $0x4c0] sm:$0xff]
    %v1099 = vld [vmem:[%s3 + $0x4c8] sm:$0xff]
    %v1100 = vld [vmem:[%s3 + $0x4d0] sm:$0xff]
    %v1101 = vld [vmem:[%s3 + $0x4d8] sm:$0xff]
    %v1102 = vld [vmem:[%s3 + $0x4e0] sm:$0xff]
    %v1103 = vld [vmem:[%s3 + $0x4e8] sm:$0xff]
    %v1104 = vld [vmem:[%s3 + $0x4f0] sm:$0xff]
    %v1105 = vld [vmem:[%s3 + $0x4f8] sm:$0xff]
    %v1106 = vld [vmem:[%s3 + $0x500] sm:$0xff]
    %v1107 = vld [vmem:[%s3 + $0x508] sm:$0xff]
    %v1108 = vld [vmem:[%s3 + $0x510] sm:$0xff]
    %v1109 = vld [vmem:[%s3 + $0x518] sm:$0xff]
    %v1110 = vld [vmem:[%s3 + $0x520] sm:$0xff]
    %v1111 = vld [vmem:[%s3 + $0x528] sm:$0xff]
    %v1112 = vld [vmem:[%s3 + $0x530] sm:$0xff]
    %v1113 = vld [vmem:[%s3 + $0x538] sm:$0xff]
    %v1114 = vld [vmem:[%s3 + $0x540] sm:$0xff]
    %v1115 = vld [vmem:[%s3 + $0x548] sm:$0xff]
    %v1116 = vld [vmem:[%s3 + $0x550] sm:$0xff]
    %v1117 = vld [vmem:[%s3 + $0x558] sm:$0xff]
    %v1118 = vld [vmem:[%s3 + $0x560] sm:$0xff]
    %v1119 = vld [vmem:[%s3 + $0x568] sm:$0xff]
    %v1120 = vld [vmem:[%s3 + $0x570] sm:$0xff]
    %v1121 = vld [vmem:[%s3 + $0x578] sm:$0xff]
    %v1122 = vld [vmem:[%s3 + $0x580] sm:$0xff]
    %v1123 = vld [vmem:[%s3 + $0x588] sm:$0xff]
    %v1124 = vld [vmem:[%s3 + $0x590] sm:$0xff]
    %v1125 = vld [vmem:[%s3 + $0x598] sm:$0xff]
    %v1126 = vld [vmem:[%s3 + $0x5a0] sm:$0xff]
    %v1127 = vld [vmem:[%s3 + $0x5a8] sm:$0xff]
    %v1128 = vld [vmem:[%s3 + $0x5b0] sm:$0xff]
    %v1129 = vld [vmem:[%s3 + $0x5b8] sm:$0xff]
    %v1130 = vld [vmem:[%s3 + $0x5c0] sm:$0xff]
    %v1131 = vld [vmem:[%s3 + $0x5c8] sm:$0xff]
    %v1132 = vld [vmem:[%s3 + $0x5d0] sm:$0xff]
    %v1133 = vld [vmem:[%s3 + $0x5d8] sm:$0xff]
    %v1134 = vld [vmem:[%s3 + $0x5e0] sm:$0xff]
    %v1135 = vld [vmem:[%s3 + $0x5e8] sm:$0xff]
    %v1136 = vld [vmem:[%s3 + $0x5f0] sm:$0xff]
    %v1137 = vld [vmem:[%s3 + $0x5f8] sm:$0xff]
    %v1138 = vld [vmem:[%s3 + $0x600] sm:$0xff]
    %v1139 = vld [vmem:[%s3 + $0x608] sm:$0xff]
    %v1140 = vld [vmem:[%s3 + $0x610] sm:$0xff]
    %v1141 = vld [vmem:[%s3 + $0x618] sm:$0xff]
    %v1142 = vld [vmem:[%s3 + $0x620] sm:$0xff]
    %v1143 = vld [vmem:[%s3 + $0x628] sm:$0xff]
    %v1144 = vld [vmem:[%s3 + $0x630] sm:$0xff]
    %v1145 = vld [vmem:[%s3 + $0x638] sm:$0xff]
    %v1146 = vld [vmem:[%s3 + $0x640] sm:$0xff]
    %v1147 = vld [vmem:[%s3 + $0x648] sm:$0xff]
    %v1148 = vld [vmem:[%s3 + $0x650] sm:$0xff]
    %v1149 = vld [vmem:[%s3 + $0x658] sm:$0xff]
    %v1150 = vld [vmem:[%s3 + $0x660] sm:$0xff]
    %v1151 = vld [vmem:[%s3 + $0x668] sm:$0xff]
    %v1152 = vld [vmem:[%s3 + $0x670] sm:$0xff]
    %v1153 = vld [vmem:[%s3 + $0x678] sm:$0xff]
    %v1154 = vld [vmem:[%s3 + $0x680] sm:$0xff]
    %v1155 = vld [vmem:[%s3 + $0x688] sm:$0xff]
    %v1156 = vld [vmem:[%s3 + $0x690] sm:$0xff]
    %v1157 = vld [vmem:[%s3 + $0x698] sm:$0xff]
    %v1158 = vld [vmem:[%s3 + $0x6a0] sm:$0xff]
    %v1159 = vld [vmem:[%s3 + $0x6a8] sm:$0xff]
    %v1160 = vld [vmem:[%s3 + $0x6b0] sm:$0xff]
    %v1161 = vld [vmem:[%s3 + $0x6b8] sm:$0xff]
    %v1162 = vld [vmem:[%s3 + $0x6c0] sm:$0xff]
    %v1163 = vld [vmem:[%s3 + $0x6c8] sm:$0xff]
    %v1164 = vld [vmem:[%s3 + $0x6d0] sm:$0xff]
    %v1165 = vld [vmem:[%s3 + $0x6d8] sm:$0xff]
    %v1166 = vld [vmem:[%s3 + $0x6e0] sm:$0xff]
    %v1167 = vld [vmem:[%s3 + $0x6e8] sm:$0xff]
    %v1168 = vld [vmem:[%s3 + $0x6f0] sm:$0xff]
    %v1169 = vld [vmem:[%s3 + $0x6f8] sm:$0xff]
    %v1170 = vld [vmem:[%s3 + $0x700] sm:$0xff]
    %v1171 = vld [vmem:[%s3 + $0x708] sm:$0xff]
    %v1172 = vld [vmem:[%s3 + $0x710] sm:$0xff]
    %v1173 = vld [vmem:[%s3 + $0x718] sm:$0xff]
    %v1174 = vld [vmem:[%s3 + $0x720] sm:$0xff]
    %v1175 = vld [vmem:[%s3 + $0x728] sm:$0xff]
    %v1176 = vld [vmem:[%s3 + $0x730] sm:$0xff]
    %v1177 = vld [vmem:[%s3 + $0x738] sm:$0xff]
    %v1178 = vld [vmem:[%s3 + $0x740] sm:$0xff]
    %v1179 = vld [vmem:[%s3 + $0x748] sm:$0xff]
    %v1180 = vld [vmem:[%s3 + $0x750] sm:$0xff]
    %v1181 = vld [vmem:[%s3 + $0x758] sm:$0xff]
    %v1182 = vld [vmem:[%s3 + $0x760] sm:$0xff]
    %v1183 = vld [vmem:[%s3 + $0x768] sm:$0xff]
    %v1184 = vld [vmem:[%s3 + $0x770] sm:$0xff]
    %v1185 = vld [vmem:[%s3 + $0x778] sm:$0xff]
    %v1186 = vld [vmem:[%s3 + $0x780] sm:$0xff]
    %v1187 = vld [vmem:[%s3 + $0x788] sm:$0xff]
    %v1188 = vld [vmem:[%s3 + $0x790] sm:$0xff]
    %v1189 = vld [vmem:[%s3 + $0x798] sm:$0xff]
    %v1190 = vld [vmem:[%s3 + $0x7a0] sm:$0xff]
    %v1191 = vld [vmem:[%s3 + $0x7a8] sm:$0xff]
    %v1192 = vld [vmem:[%s3 + $0x7b0] sm:$0xff]
    %v1193 = vld [vmem:[%s3 + $0x7b8] sm:$0xff]
    %v1194 = vld [vmem:[%s3 + $0x7c0] sm:$0xff]
    %v1195 = vld [vmem:[%s3 + $0x7c8] sm:$0xff]
    %v1196 = vld [vmem:[%s3 + $0x7d0] sm:$0xff]
    %v1197 = vld [vmem:[%s3 + $0x7d8] sm:$0xff]
    %v1198 = vld [vmem:[%s3 + $0x7e0] sm:$0xff]
    %v1199 = vld [vmem:[%s3 + $0x7e8] sm:$0xff]
    %v1200 = vld [vmem:[%s3 + $0x7f0] sm:$0xff]
    %v1201 = vld [vmem:[%s3 + $0x7f8] sm:$0xff]
    %v1202 = vld [vmem:[%s4] sm:$0x1]
    %v1204 = vlaneseq
    %v1205 = vshrl.u32 %v1204, 7
    %v1206 = vsub.s32 0, %v1205
    %v1207 = vrot.slane %v1202, %v1206
    %1209 = vmatprep.subr.mxu0 0.0
    %1210 = vmatpush1.msra.mxu0 %v946
    %1211 = vmatprep.subr.mxu0 0.0
    %1212 = vmatpush1.msra.mxu0 %v947
    %1213 = vmatprep.subr.mxu0 0.0
    %1214 = vmatpush1.msra.mxu0 %v948
    %1215 = vmatprep.subr.mxu0 0.0
    %1216 = vmatpush1.msra.mxu0 %v949
    %1217 = vmatprep.subr.mxu0 0.0
    %1218 = vmatpush1.msra.mxu0 %v950
    %1219 = vmatprep.subr.mxu0 0.0
    %1220 = vmatpush1.msra.mxu0 %v951
    %1221 = vmatprep.subr.mxu0 0.0
    %1222 = vmatpush1.msra.mxu0 %v952
    %1223 = vmatprep.subr.mxu0 0.0
    %1224 = vmatpush1.msra.mxu0 %v953
    %1225 = vmatprep.subr.mxu0 0.0
    %1226 = vmatpush1.msra.mxu0 %v954
    %1227 = vmatprep.subr.mxu0 0.0
    %1228 = vmatpush1.msra.mxu0 %v955
    %1229 = vmatprep.subr.mxu0 0.0
    %1230 = vmatpush1.msra.mxu0 %v956
    %1231 = vmatprep.subr.mxu0 0.0
    %1232 = vmatpush1.msra.mxu0 %v957
    %1233 = vmatprep.subr.mxu0 0.0
    %1234 = vmatpush1.msra.mxu0 %v958
    %1235 = vmatprep.subr.mxu0 0.0
    %1236 = vmatpush1.msra.mxu0 %v959
    %1237 = vmatprep.subr.mxu0 0.0
    %1238 = vmatpush1.msra.mxu0 %v960
    %1239 = vmatprep.subr.mxu0 0.0
    %1240 = vmatpush1.msra.mxu0 %v961
    %1241 = vmatprep.subr.mxu0 0.0
    %1242 = vmatpush1.msra.mxu0 %v962
    %1243 = vmatprep.subr.mxu0 0.0
    %1244 = vmatpush1.msra.mxu0 %v963
    %1245 = vmatprep.subr.mxu0 0.0
    %1246 = vmatpush1.msra.mxu0 %v964
    %1247 = vmatprep.subr.mxu0 0.0
    %1248 = vmatpush1.msra.mxu0 %v965
    %1249 = vmatprep.subr.mxu0 0.0
    %1250 = vmatpush1.msra.mxu0 %v966
    %1251 = vmatprep.subr.mxu0 0.0
    %1252 = vmatpush1.msra.mxu0 %v967
    %1253 = vmatprep.subr.mxu0 0.0
    %1254 = vmatpush1.msra.mxu0 %v968
    %1255 = vmatprep.subr.mxu0 0.0
    %1256 = vmatpush1.msra.mxu0 %v969
    %1257 = vmatprep.subr.mxu0 0.0
    %1258 = vmatpush1.msra.mxu0 %v970
    %1259 = vmatprep.subr.mxu0 0.0
    %1260 = vmatpush1.msra.mxu0 %v971
    %1261 = vmatprep.subr.mxu0 0.0
    %1262 = vmatpush1.msra.mxu0 %v972
    %1263 = vmatprep.subr.mxu0 0.0
    %1264 = vmatpush1.msra.mxu0 %v973
    %1265 = vmatprep.subr.mxu0 0.0
    %1266 = vmatpush1.msra.mxu0 %v974
    %1267 = vmatprep.subr.mxu0 0.0
    %1268 = vmatpush1.msra.mxu0 %v975
    %1269 = vmatprep.subr.mxu0 0.0
    %1270 = vmatpush1.msra.mxu0 %v976
    %1271 = vmatprep.subr.mxu0 0.0
    %1272 = vmatpush1.msra.mxu0 %v977
    %1273 = vmatprep.mubr.f32.mxu0 %v931
    %1274 = vmatmul.mubr.f32.gmra.mrb[0].mxu0 %v930
    %v1275 = vpop.f32.mrb[0].mxu0
    %v1276 = vadd.f32 %v1207, %v1275
    %v1277 = vpop.f32.mrb[0].mxu0
    %1278 = vdwg.mxu0
    %1279 = vmatprep.subr.mxu0 0.0
    %1280 = vmatpush1.msra.mxu0 %v978
    %1281 = vmatprep.subr.mxu0 0.0
    %1282 = vmatpush1.msra.mxu0 %v979
    %1283 = vmatprep.subr.mxu0 0.0
    %1284 = vmatpush1.msra.mxu0 %v980
    %1285 = vmatprep.subr.mxu0 0.0
    %1286 = vmatpush1.msra.mxu0 %v981
    %1287 = vmatprep.subr.mxu0 0.0
    %1288 = vmatpush1.msra.mxu0 %v982
    %1289 = vmatprep.subr.mxu0 0.0
    %1290 = vmatpush1.msra.mxu0 %v983
    %1291 = vmatprep.subr.mxu0 0.0
    %1292 = vmatpush1.msra.mxu0 %v984
    %1293 = vmatprep.subr.mxu0 0.0
    %1294 = vmatpush1.msra.mxu0 %v985
    %1295 = vmatprep.subr.mxu0 0.0
    %1296 = vmatpush1.msra.mxu0 %v986
    %1297 = vmatprep.subr.mxu0 0.0
    %1298 = vmatpush1.msra.mxu0 %v987
    %1299 = vmatprep.subr.mxu0 0.0
    %1300 = vmatpush1.msra.mxu0 %v988
    %1301 = vmatprep.subr.mxu0 0.0
    %1302 = vmatpush1.msra.mxu0 %v989
    %1303 = vmatprep.subr.mxu0 0.0
    %1304 = vmatpush1.msra.mxu0 %v990
    %1305 = vmatprep.subr.mxu0 0.0
    %1306 = vmatpush1.msra.mxu0 %v991
    %1307 = vmatprep.subr.mxu0 0.0
    %1308 = vmatpush1.msra.mxu0 %v992
    %1309 = vmatprep.subr.mxu0 0.0
    %1310 = vmatpush1.msra.mxu0 %v993
    %1311 = vmatprep.subr.mxu0 0.0
    %1312 = vmatpush1.msra.mxu0 %v994
    %1313 = vmatprep.subr.mxu0 0.0
    %1314 = vmatpush1.msra.mxu0 %v995
    %1315 = vmatprep.subr.mxu0 0.0
    %1316 = vmatpush1.msra.mxu0 %v996
    %1317 = vmatprep.subr.mxu0 0.0
    %1318 = vmatpush1.msra.mxu0 %v997
    %1319 = vmatprep.subr.mxu0 0.0
    %1320 = vmatpush1.msra.mxu0 %v998
    %1321 = vmatprep.subr.mxu0 0.0
    %1322 = vmatpush1.msra.mxu0 %v999
    %1323 = vmatprep.subr.mxu0 0.0
    %1324 = vmatpush1.msra.mxu0 %v1000
    %1325 = vmatprep.subr.mxu0 0.0
    %1326 = vmatpush1.msra.mxu0 %v1001
    %1327 = vmatprep.subr.mxu0 0.0
    %1328 = vmatpush1.msra.mxu0 %v1002
    %1329 = vmatprep.subr.mxu0 0.0
    %1330 = vmatpush1.msra.mxu0 %v1003
    %1331 = vmatprep.subr.mxu0 0.0
    %1332 = vmatpush1.msra.mxu0 %v1004
    %1333 = vmatprep.subr.mxu0 0.0
    %1334 = vmatpush1.msra.mxu0 %v1005
    %1335 = vmatprep.subr.mxu0 0.0
    %1336 = vmatpush1.msra.mxu0 %v1006
    %1337 = vmatprep.subr.mxu0 0.0
    %1338 = vmatpush1.msra.mxu0 %v1007
    %1339 = vmatprep.subr.mxu0 0.0
    %1340 = vmatpush1.msra.mxu0 %v1008
    %1341 = vmatprep.subr.mxu0 0.0
    %1342 = vmatpush1.msra.mxu0 %v1009
    %1343 = vmatprep.mubr.f32.mxu0 %v933
    %1344 = vmatmul.mubr.f32.gmra.mrb[0].mxu0 %v932
    %v1345 = vpop.f32.mrb[0].mxu0
    %v1346 = vadd.f32 %v1276, %v1345
    %v1347 = vpop.f32.mrb[0].mxu0
    %1348 = vdwg.mxu0
    %1349 = vmatprep.subr.mxu0 0.0
    %1350 = vmatpush1.msra.mxu0 %v1010
    %1351 = vmatprep.subr.mxu0 0.0
    %1352 = vmatpush1.msra.mxu0 %v1011
    %1353 = vmatprep.subr.mxu0 0.0
    %1354 = vmatpush1.msra.mxu0 %v1012
    %1355 = vmatprep.subr.mxu0 0.0
    %1356 = vmatpush1.msra.mxu0 %v1013
    %1357 = vmatprep.subr.mxu0 0.0
    %1358 = vmatpush1.msra.mxu0 %v1014
    %1359 = vmatprep.subr.mxu0 0.0
    %1360 = vmatpush1.msra.mxu0 %v1015
    %1361 = vmatprep.subr.mxu0 0.0
    %1362 = vmatpush1.msra.mxu0 %v1016
    %1363 = vmatprep.subr.mxu0 0.0
    %1364 = vmatpush1.msra.mxu0 %v1017
    %1365 = vmatprep.subr.mxu0 0.0
    %1366 = vmatpush1.msra.mxu0 %v1018
    %1367 = vmatprep.subr.mxu0 0.0
    %1368 = vmatpush1.msra.mxu0 %v1019
    %1369 = vmatprep.subr.mxu0 0.0
    %1370 = vmatpush1.msra.mxu0 %v1020
    %1371 = vmatprep.subr.mxu0 0.0
    %1372 = vmatpush1.msra.mxu0 %v1021
    %1373 = vmatprep.subr.mxu0 0.0
    %1374 = vmatpush1.msra.mxu0 %v1022
    %1375 = vmatprep.subr.mxu0 0.0
    %1376 = vmatpush1.msra.mxu0 %v1023
    %1377 = vmatprep.subr.mxu0 0.0
    %1378 = vmatpush1.msra.mxu0 %v1024
    %1379 = vmatprep.subr.mxu0 0.0
    %1380 = vmatpush1.msra.mxu0 %v1025
    %1381 = vmatprep.subr.mxu0 0.0
    %1382 = vmatpush1.msra.mxu0 %v1026
    %1383 = vmatprep.subr.mxu0 0.0
    %1384 = vmatpush1.msra.mxu0 %v1027
    %1385 = vmatprep.subr.mxu0 0.0
    %1386 = vmatpush1.msra.mxu0 %v1028
    %1387 = vmatprep.subr.mxu0 0.0
    %1388 = vmatpush1.msra.mxu0 %v1029
    %1389 = vmatprep.subr.mxu0 0.0
    %1390 = vmatpush1.msra.mxu0 %v1030
    %1391 = vmatprep.subr.mxu0 0.0
    %1392 = vmatpush1.msra.mxu0 %v1031
    %1393 = vmatprep.subr.mxu0 0.0
    %1394 = vmatpush1.msra.mxu0 %v1032
    %1395 = vmatprep.subr.mxu0 0.0
    %1396 = vmatpush1.msra.mxu0 %v1033
    %1397 = vmatprep.subr.mxu0 0.0
    %1398 = vmatpush1.msra.mxu0 %v1034
    %1399 = vmatprep.subr.mxu0 0.0
    %1400 = vmatpush1.msra.mxu0 %v1035
    %1401 = vmatprep.subr.mxu0 0.0
    %1402 = vmatpush1.msra.mxu0 %v1036
    %1403 = vmatprep.subr.mxu0 0.0
    %1404 = vmatpush1.msra.mxu0 %v1037
    %1405 = vmatprep.subr.mxu0 0.0
    %1406 = vmatpush1.msra.mxu0 %v1038
    %1407 = vmatprep.subr.mxu0 0.0
    %1408 = vmatpush1.msra.mxu0 %v1039
    %1409 = vmatprep.subr.mxu0 0.0
    %1410 = vmatpush1.msra.mxu0 %v1040
    %1411 = vmatprep.subr.mxu0 0.0
    %1412 = vmatpush1.msra.mxu0 %v1041
    %1413 = vmatprep.mubr.f32.mxu0 %v935
    %1414 = vmatmul.mubr.f32.gmra.mrb[0].mxu0 %v934
    %v1415 = vpop.f32.mrb[0].mxu0
    %v1416 = vadd.f32 %v1346, %v1415
    %v1417 = vpop.f32.mrb[0].mxu0
    %1418 = vdwg.mxu0
    %1419 = vmatprep.subr.mxu0 0.0
    %1420 = vmatpush1.msra.mxu0 %v1042
    %1421 = vmatprep.subr.mxu0 0.0
    %1422 = vmatpush1.msra.mxu0 %v1043
    %1423 = vmatprep.subr.mxu0 0.0
    %1424 = vmatpush1.msra.mxu0 %v1044
    %1425 = vmatprep.subr.mxu0 0.0
    %1426 = vmatpush1.msra.mxu0 %v1045
    %1427 = vmatprep.subr.mxu0 0.0
    %1428 = vmatpush1.msra.mxu0 %v1046
    %1429 = vmatprep.subr.mxu0 0.0
    %1430 = vmatpush1.msra.mxu0 %v1047
    %1431 = vmatprep.subr.mxu0 0.0
    %1432 = vmatpush1.msra.mxu0 %v1048
    %1433 = vmatprep.subr.mxu0 0.0
    %1434 = vmatpush1.msra.mxu0 %v1049
    %1435 = vmatprep.subr.mxu0 0.0
    %1436 = vmatpush1.msra.mxu0 %v1050
    %1437 = vmatprep.subr.mxu0 0.0
    %1438 = vmatpush1.msra.mxu0 %v1051
    %1439 = vmatprep.subr.mxu0 0.0
    %1440 = vmatpush1.msra.mxu0 %v1052
    %1441 = vmatprep.subr.mxu0 0.0
    %1442 = vmatpush1.msra.mxu0 %v1053
    %1443 = vmatprep.subr.mxu0 0.0
    %1444 = vmatpush1.msra.mxu0 %v1054
    %1445 = vmatprep.subr.mxu0 0.0
    %1446 = vmatpush1.msra.mxu0 %v1055
    %1447 = vmatprep.subr.mxu0 0.0
    %1448 = vmatpush1.msra.mxu0 %v1056
    %1449 = vmatprep.subr.mxu0 0.0
    %1450 = vmatpush1.msra.mxu0 %v1057
    %1451 = vmatprep.subr.mxu0 0.0
    %1452 = vmatpush1.msra.mxu0 %v1058
    %1453 = vmatprep.subr.mxu0 0.0
    %1454 = vmatpush1.msra.mxu0 %v1059
    %1455 = vmatprep.subr.mxu0 0.0
    %1456 = vmatpush1.msra.mxu0 %v1060
    %1457 = vmatprep.subr.mxu0 0.0
    %1458 = vmatpush1.msra.mxu0 %v1061
    %1459 = vmatprep.subr.mxu0 0.0
    %1460 = vmatpush1.msra.mxu0 %v1062
    %1461 = vmatprep.subr.mxu0 0.0
    %1462 = vmatpush1.msra.mxu0 %v1063
    %1463 = vmatprep.subr.mxu0 0.0
    %1464 = vmatpush1.msra.mxu0 %v1064
    %1465 = vmatprep.subr.mxu0 0.0
    %1466 = vmatpush1.msra.mxu0 %v1065
    %1467 = vmatprep.subr.mxu0 0.0
    %1468 = vmatpush1.msra.mxu0 %v1066
    %1469 = vmatprep.subr.mxu0 0.0
    %1470 = vmatpush1.msra.mxu0 %v1067
    %1471 = vmatprep.subr.mxu0 0.0
    %1472 = vmatpush1.msra.mxu0 %v1068
    %1473 = vmatprep.subr.mxu0 0.0
    %1474 = vmatpush1.msra.mxu0 %v1069
    %1475 = vmatprep.subr.mxu0 0.0
    %1476 = vmatpush1.msra.mxu0 %v1070
    %1477 = vmatprep.subr.mxu0 0.0
    %1478 = vmatpush1.msra.mxu0 %v1071
    %1479 = vmatprep.subr.mxu0 0.0
    %1480 = vmatpush1.msra.mxu0 %v1072
    %1481 = vmatprep.subr.mxu0 0.0
    %1482 = vmatpush1.msra.mxu0 %v1073
    %1483 = vmatprep.mubr.f32.mxu0 %v937
    %1484 = vmatmul.mubr.f32.gmra.mrb[0].mxu0 %v936
    %v1485 = vpop.f32.mrb[0].mxu0
    %v1486 = vadd.f32 %v1416, %v1485
    %v1487 = vpop.f32.mrb[0].mxu0
    %1488 = vdwg.mxu0
    %1489 = vmatprep.subr.mxu0 0.0
    %1490 = vmatpush1.msra.mxu0 %v1074
    %1491 = vmatprep.subr.mxu0 0.0
    %1492 = vmatpush1.msra.mxu0 %v1075
    %1493 = vmatprep.subr.mxu0 0.0
    %1494 = vmatpush1.msra.mxu0 %v1076
    %1495 = vmatprep.subr.mxu0 0.0
    %1496 = vmatpush1.msra.mxu0 %v1077
    %1497 = vmatprep.subr.mxu0 0.0
    %1498 = vmatpush1.msra.mxu0 %v1078
    %1499 = vmatprep.subr.mxu0 0.0
    %1500 = vmatpush1.msra.mxu0 %v1079
    %1501 = vmatprep.subr.mxu0 0.0
    %1502 = vmatpush1.msra.mxu0 %v1080
    %1503 = vmatprep.subr.mxu0 0.0
    %1504 = vmatpush1.msra.mxu0 %v1081
    %1505 = vmatprep.subr.mxu0 0.0
    %1506 = vmatpush1.msra.mxu0 %v1082
    %1507 = vmatprep.subr.mxu0 0.0
    %1508 = vmatpush1.msra.mxu0 %v1083
    %1509 = vmatprep.subr.mxu0 0.0
    %1510 = vmatpush1.msra.mxu0 %v1084
    %1511 = vmatprep.subr.mxu0 0.0
    %1512 = vmatpush1.msra.mxu0 %v1085
    %1513 = vmatprep.subr.mxu0 0.0
    %1514 = vmatpush1.msra.mxu0 %v1086
    %1515 = vmatprep.subr.mxu0 0.0
    %1516 = vmatpush1.msra.mxu0 %v1087
    %1517 = vmatprep.subr.mxu0 0.0
    %1518 = vmatpush1.msra.mxu0 %v1088
    %1519 = vmatprep.subr.mxu0 0.0
    %1520 = vmatpush1.msra.mxu0 %v1089
    %1521 = vmatprep.subr.mxu0 0.0
    %1522 = vmatpush1.msra.mxu0 %v1090
    %1523 = vmatprep.subr.mxu0 0.0
    %1524 = vmatpush1.msra.mxu0 %v1091
    %1525 = vmatprep.subr.mxu0 0.0
    %1526 = vmatpush1.msra.mxu0 %v1092
    %1527 = vmatprep.subr.mxu0 0.0
    %1528 = vmatpush1.msra.mxu0 %v1093
    %1529 = vmatprep.subr.mxu0 0.0
    %1530 = vmatpush1.msra.mxu0 %v1094
    %1531 = vmatprep.subr.mxu0 0.0
    %1532 = vmatpush1.msra.mxu0 %v1095
    %1533 = vmatprep.subr.mxu0 0.0
    %1534 = vmatpush1.msra.mxu0 %v1096
    %1535 = vmatprep.subr.mxu0 0.0
    %1536 = vmatpush1.msra.mxu0 %v1097
    %1537 = vmatprep.subr.mxu0 0.0
    %1538 = vmatpush1.msra.mxu0 %v1098
    %1539 = vmatprep.subr.mxu0 0.0
    %1540 = vmatpush1.msra.mxu0 %v1099
    %1541 = vmatprep.subr.mxu0 0.0
    %1542 = vmatpush1.msra.mxu0 %v1100
    %1543 = vmatprep.subr.mxu0 0.0
    %1544 = vmatpush1.msra.mxu0 %v1101
    %1545 = vmatprep.subr.mxu0 0.0
    %1546 = vmatpush1.msra.mxu0 %v1102
    %1547 = vmatprep.subr.mxu0 0.0
    %1548 = vmatpush1.msra.mxu0 %v1103
    %1549 = vmatprep.subr.mxu0 0.0
    %1550 = vmatpush1.msra.mxu0 %v1104
    %1551 = vmatprep.subr.mxu0 0.0
    %1552 = vmatpush1.msra.mxu0 %v1105
    %1553 = vmatprep.mubr.f32.mxu0 %v939
    %1554 = vmatmul.mubr.f32.gmra.mrb[0].mxu0 %v938
    %v1555 = vpop.f32.mrb[0].mxu0
    %v1556 = vadd.f32 %v1486, %v1555
    %v1557 = vpop.f32.mrb[0].mxu0
    %1558 = vdwg.mxu0
    %1559 = vmatprep.subr.mxu0 0.0
    %1560 = vmatpush1.msra.mxu0 %v1106
    %1561 = vmatprep.subr.mxu0 0.0
    %1562 = vmatpush1.msra.mxu0 %v1107
    %1563 = vmatprep.subr.mxu0 0.0
    %1564 = vmatpush1.msra.mxu0 %v1108
    %1565 = vmatprep.subr.mxu0 0.0
    %1566 = vmatpush1.msra.mxu0 %v1109
    %1567 = vmatprep.subr.mxu0 0.0
    %1568 = vmatpush1.msra.mxu0 %v1110
    %1569 = vmatprep.subr.mxu0 0.0
    %1570 = vmatpush1.msra.mxu0 %v1111
    %1571 = vmatprep.subr.mxu0 0.0
    %1572 = vmatpush1.msra.mxu0 %v1112
    %1573 = vmatprep.subr.mxu0 0.0
    %1574 = vmatpush1.msra.mxu0 %v1113
    %1575 = vmatprep.subr.mxu0 0.0
    %1576 = vmatpush1.msra.mxu0 %v1114
    %1577 = vmatprep.subr.mxu0 0.0
    %1578 = vmatpush1.msra.mxu0 %v1115
    %1579 = vmatprep.subr.mxu0 0.0
    %1580 = vmatpush1.msra.mxu0 %v1116
    %1581 = vmatprep.subr.mxu0 0.0
    %1582 = vmatpush1.msra.mxu0 %v1117
    %1583 = vmatprep.subr.mxu0 0.0
    %1584 = vmatpush1.msra.mxu0 %v1118
    %1585 = vmatprep.subr.mxu0 0.0
    %1586 = vmatpush1.msra.mxu0 %v1119
    %1587 = vmatprep.subr.mxu0 0.0
    %1588 = vmatpush1.msra.mxu0 %v1120
    %1589 = vmatprep.subr.mxu0 0.0
    %1590 = vmatpush1.msra.mxu0 %v1121
    %1591 = vmatprep.subr.mxu0 0.0
    %1592 = vmatpush1.msra.mxu0 %v1122
    %1593 = vmatprep.subr.mxu0 0.0
    %1594 = vmatpush1.msra.mxu0 %v1123
    %1595 = vmatprep.subr.mxu0 0.0
    %1596 = vmatpush1.msra.mxu0 %v1124
    %1597 = vmatprep.subr.mxu0 0.0
    %1598 = vmatpush1.msra.mxu0 %v1125
    %1599 = vmatprep.subr.mxu0 0.0
    %1600 = vmatpush1.msra.mxu0 %v1126
    %1601 = vmatprep.subr.mxu0 0.0
    %1602 = vmatpush1.msra.mxu0 %v1127
    %1603 = vmatprep.subr.mxu0 0.0
    %1604 = vmatpush1.msra.mxu0 %v1128
    %1605 = vmatprep.subr.mxu0 0.0
    %1606 = vmatpush1.msra.mxu0 %v1129
    %1607 = vmatprep.subr.mxu0 0.0
    %1608 = vmatpush1.msra.mxu0 %v1130
    %1609 = vmatprep.subr.mxu0 0.0
    %1610 = vmatpush1.msra.mxu0 %v1131
    %1611 = vmatprep.subr.mxu0 0.0
    %1612 = vmatpush1.msra.mxu0 %v1132
    %1613 = vmatprep.subr.mxu0 0.0
    %1614 = vmatpush1.msra.mxu0 %v1133
    %1615 = vmatprep.subr.mxu0 0.0
    %1616 = vmatpush1.msra.mxu0 %v1134
    %1617 = vmatprep.subr.mxu0 0.0
    %1618 = vmatpush1.msra.mxu0 %v1135
    %1619 = vmatprep.subr.mxu0 0.0
    %1620 = vmatpush1.msra.mxu0 %v1136
    %1621 = vmatprep.subr.mxu0 0.0
    %1622 = vmatpush1.msra.mxu0 %v1137
    %1623 = vmatprep.mubr.f32.mxu0 %v941
    %1624 = vmatmul.mubr.f32.gmra.mrb[0].mxu0 %v940
    %v1625 = vpop.f32.mrb[0].mxu0
    %v1626 = vadd.f32 %v1556, %v1625
    %v1627 = vpop.f32.mrb[0].mxu0
    %1628 = vdwg.mxu0
    %1629 = vmatprep.subr.mxu0 0.0
    %1630 = vmatpush1.msra.mxu0 %v1138
    %1631 = vmatprep.subr.mxu0 0.0
    %1632 = vmatpush1.msra.mxu0 %v1139
    %1633 = vmatprep.subr.mxu0 0.0
    %1634 = vmatpush1.msra.mxu0 %v1140
    %1635 = vmatprep.subr.mxu0 0.0
    %1636 = vmatpush1.msra.mxu0 %v1141
    %1637 = vmatprep.subr.mxu0 0.0
    %1638 = vmatpush1.msra.mxu0 %v1142
    %1639 = vmatprep.subr.mxu0 0.0
    %1640 = vmatpush1.msra.mxu0 %v1143
    %1641 = vmatprep.subr.mxu0 0.0
    %1642 = vmatpush1.msra.mxu0 %v1144
    %1643 = vmatprep.subr.mxu0 0.0
    %1644 = vmatpush1.msra.mxu0 %v1145
    %1645 = vmatprep.subr.mxu0 0.0
    %1646 = vmatpush1.msra.mxu0 %v1146
    %1647 = vmatprep.subr.mxu0 0.0
    %1648 = vmatpush1.msra.mxu0 %v1147
    %1649 = vmatprep.subr.mxu0 0.0
    %1650 = vmatpush1.msra.mxu0 %v1148
    %1651 = vmatprep.subr.mxu0 0.0
    %1652 = vmatpush1.msra.mxu0 %v1149
    %1653 = vmatprep.subr.mxu0 0.0
    %1654 = vmatpush1.msra.mxu0 %v1150
    %1655 = vmatprep.subr.mxu0 0.0
    %1656 = vmatpush1.msra.mxu0 %v1151
    %1657 = vmatprep.subr.mxu0 0.0
    %1658 = vmatpush1.msra.mxu0 %v1152
    %1659 = vmatprep.subr.mxu0 0.0
    %1660 = vmatpush1.msra.mxu0 %v1153
    %1661 = vmatprep.subr.mxu0 0.0
    %1662 = vmatpush1.msra.mxu0 %v1154
    %1663 = vmatprep.subr.mxu0 0.0
    %1664 = vmatpush1.msra.mxu0 %v1155
    %1665 = vmatprep.subr.mxu0 0.0
    %1666 = vmatpush1.msra.mxu0 %v1156
    %1667 = vmatprep.subr.mxu0 0.0
    %1668 = vmatpush1.msra.mxu0 %v1157
    %1669 = vmatprep.subr.mxu0 0.0
    %1670 = vmatpush1.msra.mxu0 %v1158
    %1671 = vmatprep.subr.mxu0 0.0
    %1672 = vmatpush1.msra.mxu0 %v1159
    %1673 = vmatprep.subr.mxu0 0.0
    %1674 = vmatpush1.msra.mxu0 %v1160
    %1675 = vmatprep.subr.mxu0 0.0
    %1676 = vmatpush1.msra.mxu0 %v1161
    %1677 = vmatprep.subr.mxu0 0.0
    %1678 = vmatpush1.msra.mxu0 %v1162
    %1679 = vmatprep.subr.mxu0 0.0
    %1680 = vmatpush1.msra.mxu0 %v1163
    %1681 = vmatprep.subr.mxu0 0.0
    %1682 = vmatpush1.msra.mxu0 %v1164
    %1683 = vmatprep.subr.mxu0 0.0
    %1684 = vmatpush1.msra.mxu0 %v1165
    %1685 = vmatprep.subr.mxu0 0.0
    %1686 = vmatpush1.msra.mxu0 %v1166
    %1687 = vmatprep.subr.mxu0 0.0
    %1688 = vmatpush1.msra.mxu0 %v1167
    %1689 = vmatprep.subr.mxu0 0.0
    %1690 = vmatpush1.msra.mxu0 %v1168
    %1691 = vmatprep.subr.mxu0 0.0
    %1692 = vmatpush1.msra.mxu0 %v1169
    %1693 = vmatprep.mubr.f32.mxu0 %v943
    %1694 = vmatmul.mubr.f32.gmra.mrb[0].mxu0 %v942
    %v1695 = vpop.f32.mrb[0].mxu0
    %v1696 = vadd.f32 %v1626, %v1695
    %v1697 = vpop.f32.mrb[0].mxu0
    %1698 = vdwg.mxu0
    %1699 = vmatprep.subr.mxu0 0.0
    %1700 = vmatpush1.msra.mxu0 %v1170
    %1701 = vmatprep.subr.mxu0 0.0
    %1702 = vmatpush1.msra.mxu0 %v1171
    %1703 = vmatprep.subr.mxu0 0.0
    %1704 = vmatpush1.msra.mxu0 %v1172
    %1705 = vmatprep.subr.mxu0 0.0
    %1706 = vmatpush1.msra.mxu0 %v1173
    %1707 = vmatprep.subr.mxu0 0.0
    %1708 = vmatpush1.msra.mxu0 %v1174
    %1709 = vmatprep.subr.mxu0 0.0
    %1710 = vmatpush1.msra.mxu0 %v1175
    %1711 = vmatprep.subr.mxu0 0.0
    %1712 = vmatpush1.msra.mxu0 %v1176
    %1713 = vmatprep.subr.mxu0 0.0
    %1714 = vmatpush1.msra.mxu0 %v1177
    %1715 = vmatprep.subr.mxu0 0.0
    %1716 = vmatpush1.msra.mxu0 %v1178
    %1717 = vmatprep.subr.mxu0 0.0
    %1718 = vmatpush1.msra.mxu0 %v1179
    %1719 = vmatprep.subr.mxu0 0.0
    %1720 = vmatpush1.msra.mxu0 %v1180
    %1721 = vmatprep.subr.mxu0 0.0
    %1722 = vmatpush1.msra.mxu0 %v1181
    %1723 = vmatprep.subr.mxu0 0.0
    %1724 = vmatpush1.msra.mxu0 %v1182
    %1725 = vmatprep.subr.mxu0 0.0
    %1726 = vmatpush1.msra.mxu0 %v1183
    %1727 = vmatprep.subr.mxu0 0.0
    %1728 = vmatpush1.msra.mxu0 %v1184
    %1729 = vmatprep.subr.mxu0 0.0
    %1730 = vmatpush1.msra.mxu0 %v1185
    %1731 = vmatprep.subr.mxu0 0.0
    %1732 = vmatpush1.msra.mxu0 %v1186
    %1733 = vmatprep.subr.mxu0 0.0
    %1734 = vmatpush1.msra.mxu0 %v1187
    %1735 = vmatprep.subr.mxu0 0.0
    %1736 = vmatpush1.msra.mxu0 %v1188
    %1737 = vmatprep.subr.mxu0 0.0
    %1738 = vmatpush1.msra.mxu0 %v1189
    %1739 = vmatprep.subr.mxu0 0.0
    %1740 = vmatpush1.msra.mxu0 %v1190
    %1741 = vmatprep.subr.mxu0 0.0
    %1742 = vmatpush1.msra.mxu0 %v1191
    %1743 = vmatprep.subr.mxu0 0.0
    %1744 = vmatpush1.msra.mxu0 %v1192
    %1745 = vmatprep.subr.mxu0 0.0
    %1746 = vmatpush1.msra.mxu0 %v1193
    %1747 = vmatprep.subr.mxu0 0.0
    %1748 = vmatpush1.msra.mxu0 %v1194
    %1749 = vmatprep.subr.mxu0 0.0
    %1750 = vmatpush1.msra.mxu0 %v1195
    %1751 = vmatprep.subr.mxu0 0.0
    %1752 = vmatpush1.msra.mxu0 %v1196
    %1753 = vmatprep.subr.mxu0 0.0
    %1754 = vmatpush1.msra.mxu0 %v1197
    %1755 = vmatprep.subr.mxu0 0.0
    %1756 = vmatpush1.msra.mxu0 %v1198
    %1757 = vmatprep.subr.mxu0 0.0
    %1758 = vmatpush1.msra.mxu0 %v1199
    %1759 = vmatprep.subr.mxu0 0.0
    %1760 = vmatpush1.msra.mxu0 %v1200
    %1761 = vmatprep.subr.mxu0 0.0
    %1762 = vmatpush1.msra.mxu0 %v1201
    %1763 = vmatprep.mubr.f32.mxu0 %v945
    %1764 = vmatmul.mubr.f32.gmra.mrb[0].mxu0 %v944
    %v1765 = vpop.f32.mrb[0].mxu0
    %v1766 = vadd.f32 %v1696, %v1765
    %v1767 = vpop.f32.mrb[0].mxu0
    %1768 = vdwg.mxu0
    %vm1769 = vcmask 523264
    %1770 = vst.msk [vmem:[#allocation2] sm:$0xff] %vm1769, %v1766
    // Predicated region
    $region22: #{tpu_custom_call.1} parent=1 // pred_check
      _
    $region23: #{tpu_custom_call.1} parent=1 // pred_check_branch
      %1772 = sbr.rel (0) target = $region25
    $region24: #{tpu_custom_call.1} parent=1 // pred_region
      %s1774 = ssub.s32 128, 128
      %1775 = vsyncadd [#allocation3], %s1774
      %s1777 = sshll.u32 [#allocation2], 4
      %s1778 = int_to_ptr.vmem [resolvable:$true] %s1777
      %1780 = dma.vmem_to_hbm [thread:$0]  %s1778, 128, %s5, [#allocation3]
    $region25: #{tpu_custom_call.1} parent=1 // pred_fallthru
      _
    // Predicated region
    $region26: #{tpu_custom_call.1} parent=1 // pred_check
      _
    $region27: #{tpu_custom_call.1} parent=1 // pred_check_branch
      %1782 = sbr.rel (0) target = $region29
    $region28: #{tpu_custom_call.1} parent=1 // pred_region
      %1783 = dma.done [#allocation3], 128
    $region29: #{tpu_custom_call.1} parent=1 // pred_fallthru
      _
    %1784 = vsyncpa [#allocation3], 1

</llo_original>
